<compile_context>
chip_gen: v5e
topology: v5e:2x2
jax: 0.10.0
libtpu: 0.0.40
codegen_flags: <defaults>
</compile_context>

<pallas_src>
import jax
import jax.numpy as jnp
from jax.experimental import pallas as pl
from jax.experimental.pallas import tpu as pltpu


def _round_up(x, m):
  return (x + m - 1) // m * m


# ----------------------------------------------------------------------------
# Kernel: one grid step = B batch rows, full (padded) sequence S.
# ----------------------------------------------------------------------------
def _attention_kernel(
    key_ref,     # (B, S, E)    kv dtype (bf16/f32)
    val_ref,     # (B, S, E)    kv dtype
    amask_ref,   # (B, S)       f32 additive attention mask, S on lanes
    imask_ref,   # (B, S)       f32 multiplicative input mask, S on lanes
    cov_ref,     # (B, S, 1)    f32 coverage attention
    dvec_ref,    # (B, Hd+E+1)  f32 [dec@W1_dec+b1 | dec@Wu_dec+bu | dec@Wp_dec+bp]
    wkey_ref,    # (E, Wk)      f32 [W1_key | wp_key | 0-pad], Wk = rup(Hd+1,128)
    wctx_ref,    # (E, Wc)      f32 [Wu_ctx | wp_ctx | 0-pad], Wc = rup(E+1,128)
    vecs_ref,    # (2, Hd)      f32 row0 = W1 coverage row, row1 = W2[:, 0]
    ctx_ref,     # (B, E)       f32
    scores_ref,  # (B, S)       f32, S on lanes (lane-dense store)
    keyout_ref,  # (B, S, E)    f32
):
  f32 = jnp.float32
  B, S, E = key_ref.shape
  Hd = vecs_ref.shape[-1]

  key = key_ref[...]

  # --- fused key-side projection on the MXU: [W1_key | Wp_key] -------------
  # The (B*S, E) flatten is layout preserving (S % 8 == 0 by construction).
  kproj = jnp.dot(key.reshape(B * S, E), wkey_ref[...].astype(key.dtype),
                  preferred_element_type=f32).reshape(B, S, -1)
  z1key = kproj[:, :, :Hd]             # (B, S, Hd)
  zp_key = kproj[:, :, Hd:Hd + 1]      # (B, S, 1)

  dvec = dvec_ref[...]
  dec1 = dvec[:, :Hd]                  # (B, Hd)  dec @ W1_dec + b1
  decu = dvec[:, Hd:Hd + E]            # (B, E)   dec @ Wu_dec + bu
  decp = dvec[:, Hd + E:Hd + E + 1]    # (B, 1)   dec @ Wp_dec + bp

  vecs = vecs_ref[...]
  w1c = vecs[0:1, :]                   # (1, Hd) coverage column of W1
  w2 = vecs[1:2, :]                    # (1, Hd) attn_linear2 weight

  # --- energy / softmax (lane-major: S on the 128-lane axis) ----------------
  z1 = z1key + dec1[:, None, :] + cov_ref[...] * w1c
  energy = jnp.sum(jnp.tanh(z1) * w2, axis=-1)           # (B, S)
  # b2 omitted: softmax is shift-invariant, so it cancels exactly.
  logits = energy + amask_ref[...]
  m = jnp.max(logits, axis=-1, keepdims=True)
  p = jnp.exp(logits - m)
  denom = jnp.sum(p, axis=-1, keepdims=True)
  scores = (p / denom) * imask_ref[...]                   # exact divide

  # --- context vector: batched MXU contraction over S -----------------------
  val = val_ref[...]
  ctx = jax.lax.dot_general(
      scores.astype(val.dtype)[:, None, :], val,
      dimension_numbers=(((2,), (1,)), ((0,), (0,))),
      preferred_element_type=f32)[:, 0, :]                # (B, E)

  # --- scratchpad update: fused ctx-side projection [Wu_ctx | Wp_ctx] -------
  cproj = jnp.dot(ctx, wctx_ref[...], preferred_element_type=f32)   # (B, Wc)
  u = jnp.tanh(cproj[:, :E] + decu)                       # (B, E)
  zp = zp_key + (cproj[:, E:E + 1] + decp)[:, None, :]    # (B, S, 1)
  not_write = jax.nn.sigmoid(zp)
  key_f32 = key.astype(f32)
  key_new = not_write * key_f32 + (1.0 - not_write) * u[:, None, :]

  ctx_ref[...] = ctx
  scores_ref[...] = scores
  keyout_ref[...] = key_new


# ----------------------------------------------------------------------------
# Batch-block selection (multiple of 8; MiB-scale steps; >= 2 steps if we can)
# ----------------------------------------------------------------------------
def _choose_block_batch(N, S, E, Hd, kv_bytes, requested=None):
  if requested is None:
    wk = _round_up(Hd + 1, 128)
    # Rough steady-state VMEM bytes per batch row: double-buffered streams
    # (key+val in kv dtype, keyout f32, masks/cov/scores) plus the largest
    # live f32 intermediates (kproj, tanh, key_new).  Budget ~24 MiB so we
    # stay inside a 32 MiB scoped-VMEM limit on every generation (v7x incl.).
    per_row = S * (2 * (2 * E * kv_bytes + 4 * E + 16) + 4 * (wk + Hd + E))
    requested = (24 << 20) // max(per_row, 1)
  B = max(8, (min(int(requested), 1024) // 8) * 8)
  N8 = _round_up(max(N, 1), 8)
  B = min(B, N8)
  if B >= N8 and N8 >= 16:
    # Keep at least two grid steps so both v7x TensorCores get work.
    B = _round_up(N8 // 2, 8)
  Np = _round_up(N, B)
  return B, Np


# ----------------------------------------------------------------------------
# Wrapper
# ----------------------------------------------------------------------------
def attention_forward(params, key_enc, val_enc, dec_state,
                      attention_mask, input_mask, coverage_attn,
                      *, block_batch=None, kv_dtype=jnp.bfloat16):
  """Mirrors attention.forward with coverage_mechanism=True, scratchpad=True.

  key_enc / val_enc: (N, S, 2*He)
  dec_state:         (N, Hd)
  attention_mask:    (N, S, 1)  additive
  input_mask:        (N, S)     multiplicative 0/1
  coverage_attn:     (N, S, 1)
  """
  f32 = jnp.float32
  N, S0, E = key_enc.shape
  Hd = dec_state.shape[-1]

  W1, b1 = params["W1"], params["b1"]
  W2 = params["W2"]
  Wp, bp = params["Wp"], params["bp"]
  Wu, bu = params["Wu"], params["bu"]
  # params["b2"] is a constant shift of the softmax input -> drops out exactly.

  # Split Linear weights along the concatenation axis.
  w1_key = W1[:E]                       # (E, Hd)
  w1_dec = W1[E:E + Hd]                 # (Hd, Hd)
  w1_cov = W1[E + Hd]                   # (Hd,)
  wp_dec = Wp[:Hd]                      # (Hd, 1)
  wp_ctx = Wp[Hd:Hd + E]                # (E, 1)
  wp_key = Wp[Hd + E:]                  # (E, 1)
  wu_dec = Wu[:Hd]                      # (Hd, E)
  wu_ctx = Wu[Hd:]                      # (E, E)

  # Hoist all S-invariant decoder-state matmuls (one batched XLA matmul each)
  # and pack them into a single per-batch stream.
  dvec = jnp.concatenate(
      [dec_state @ w1_dec + b1,         # (N, Hd)
       dec_state @ wu_dec + bu,         # (N, E)
       dec_state @ wp_dec + bp],        # (N, 1)
      axis=-1).astype(f32)              # (N, Hd + E + 1)

  # Packed, lane-padded weights.
  Wk = _round_up(Hd + 1, 128)
  Wc = _round_up(E + 1, 128)
  wkey = jnp.zeros((E, Wk), f32).at[:, :Hd].set(w1_key.astype(f32))
  wkey = wkey.at[:, Hd].set(wp_key[:, 0].astype(f32))
  wctx = jnp.zeros((E, Wc), f32).at[:, :E].set(wu_ctx.astype(f32))
  wctx = wctx.at[:, E].set(wp_ctx[:, 0].astype(f32))
  vecs = jnp.stack([w1_cov, W2[:, 0]], axis=0).astype(f32)      # (2, Hd)

  # Lane-major (S-last) mask streams; bf16 key/value streams.
  amask = attention_mask.reshape(N, S0).astype(f32)
  imask = input_mask.reshape(N, S0).astype(f32)
  cov = coverage_attn.astype(f32)
  key_p = key_enc.astype(kv_dtype)
  val_p = val_enc.astype(kv_dtype)

  # Pad S to a multiple of 8 so the in-kernel flatten is layout preserving.
  S = _round_up(S0, 8)
  if S != S0:
    ps = S - S0
    key_p = jnp.pad(key_p, ((0, 0), (0, ps), (0, 0)))
    val_p = jnp.pad(val_p, ((0, 0), (0, ps), (0, 0)))
    cov = jnp.pad(cov, ((0, 0), (0, ps), (0, 0)))
    amask = jnp.pad(amask, ((0, 0), (0, ps)), constant_values=-1e9)
    imask = jnp.pad(imask, ((0, 0), (0, ps)))

  # Batch blocking.
  kv_bytes = jnp.dtype(kv_dtype).itemsize
  B, Np = _choose_block_batch(N, S, E, Hd, kv_bytes, block_batch)
  if Np != N:
    pn = Np - N
    key_p = jnp.pad(key_p, ((0, pn), (0, 0), (0, 0)))
    val_p = jnp.pad(val_p, ((0, pn), (0, 0), (0, 0)))
    cov = jnp.pad(cov, ((0, pn), (0, 0), (0, 0)))
    amask = jnp.pad(amask, ((0, pn), (0, 0)))
    imask = jnp.pad(imask, ((0, pn), (0, 0)))
    dvec = jnp.pad(dvec, ((0, pn), (0, 0)))

  row3 = lambda *blk: pl.BlockSpec(blk, lambda b: (b, 0, 0))
  row2 = lambda *blk: pl.BlockSpec(blk, lambda b: (b, 0))
  const2 = lambda *blk: pl.BlockSpec(blk, lambda b: (0, 0))

  ctx, scores, key_new = pl.pallas_call(
      _attention_kernel,
      grid=(Np // B,),
      in_specs=[
          row3(B, S, E),            # key (kv dtype)
          row3(B, S, E),            # value (kv dtype)
          row2(B, S),               # additive attention mask (lane-major)
          row2(B, S),               # input mask (lane-major)
          row3(B, S, 1),            # coverage
          row2(B, Hd + E + 1),      # packed decoder-state projections
          const2(E, Wk),            # [W1_key | Wp_key]
          const2(E, Wc),            # [Wu_ctx | Wp_ctx]
          const2(2, Hd),            # [W1_cov ; W2^T]
      ],
      out_specs=(
          row2(B, E),               # context vector
          row2(B, S),               # attention scores (lane-dense store)
          row3(B, S, E),            # updated key encoder states
      ),
      out_shape=(
          jax.ShapeDtypeStruct((Np, E), f32),
          jax.ShapeDtypeStruct((Np, S), f32),
          jax.ShapeDtypeStruct((Np, S, E), f32),
      ),
      compiler_params=pltpu.CompilerParams(
          dimension_semantics=("parallel",),
          vmem_limit_bytes=32 * 1024 * 1024),
  )(key_p, val_p, amask, imask, cov, dvec, wkey, wctx, vecs)

  ctx = ctx[:N]
  scores = scores[:N, :S0]
  key_new = key_new[:N, :S0]

  # Trivial elementwise epilogue kept in XLA (keeps more width-1 streams out
  # of the kernel): coverage update + coverage loss.
  scores3 = scores[:, :, None]
  cov_new = coverage_attn + scores3
  imask0 = input_mask.reshape(N, S0).astype(f32)
  cov_loss = jnp.sum(jnp.minimum(scores, coverage_attn[:, :, 0]) * imask0,
                     axis=1)

  return {
      "context_vector": ctx,
      "attention_scores": scores3,
      "key_encoder_states": key_new,
      "coverage_attn": cov_new,
      "coverage_loss": cov_loss,
  }


# ----------------------------------------------------------------------------
# Pure-JAX reference (mirrors the PyTorch forward, for verification)
# ----------------------------------------------------------------------------
def reference_forward(params, key_enc, val_enc, dec_state,
                      attention_mask, input_mask, coverage_attn):
  N, S, twoHe = key_enc.shape
  dec_rep = jnp.repeat(dec_state[:, None, :], S, axis=1)
  x1 = jnp.concatenate([key_enc, dec_rep, coverage_attn], axis=-1)
  energy = jnp.tanh(x1 @ params["W1"] + params["b1"]) @ params["W2"] + params["b2"]
  scores = jax.nn.softmax(energy + attention_mask, axis=1) * input_mask[..., None]
  ctx = jnp.sum(scores * val_enc, axis=1)
  cov_loss = jnp.sum(jnp.minimum(scores, coverage_attn)[..., 0] * input_mask, axis=1)
  cov_new = coverage_attn + scores
  ctx_rep = jnp.repeat(ctx[:, None, :], S, axis=1)
  nwp = jax.nn.sigmoid(
      jnp.concatenate([dec_rep, ctx_rep, key_enc], -1) @ params["Wp"] + params["bp"])
  u = jnp.tanh(jnp.concatenate([dec_rep, ctx_rep], -1) @ params["Wu"] + params["bu"])
  key_new = nwp * key_enc + (1.0 - nwp) * u
  return {
      "context_vector": ctx,
      "attention_scores": scores,
      "key_encoder_states": key_new,
      "coverage_attn": cov_new,
      "coverage_loss": cov_loss,
  }


def init_params(rng, He, Hd):
  twoHe = 2 * He
  ks = jax.random.split(rng, 8)
  s = 0.1
  return {
      "W1": jax.random.normal(ks[0], (twoHe + Hd + 1, Hd), jnp.float32) * s,
      "b1": jax.random.normal(ks[1], (Hd,), jnp.float32) * s,
      "W2": jax.random.normal(ks[2], (Hd, 1), jnp.float32) * s,
      "b2": jax.random.normal(ks[3], (1,), jnp.float32) * s,
      "Wp": jax.random.normal(ks[4], (2 * twoHe + Hd, 1), jnp.float32) * s,
      "bp": jax.random.normal(ks[5], (1,), jnp.float32) * s,
      "Wu": jax.random.normal(ks[6], (twoHe + Hd, twoHe), jnp.float32) * s,
      "bu": jax.random.normal(ks[7], (twoHe,), jnp.float32) * s,
  }


if __name__ == "__main__":
  N, S, He, Hd = 2, 8, 16, 32
  twoHe = 2 * He

  root = jax.random.PRNGKey(0)
  kp, k1, k2, k3, k4 = jax.random.split(root, 5)
  params = init_params(kp, He, Hd)

  key_enc = jax.random.normal(k1, (N, S, twoHe), jnp.float32)
  val_enc = jax.random.normal(k2, (N, S, twoHe), jnp.float32)
  dec_state = jax.random.normal(k3, (N, Hd), jnp.float32)

  lengths = jnp.array([S, 5], dtype=jnp.int32)
  input_mask = (jnp.arange(S)[None, :] < lengths[:, None]).astype(jnp.float32)  # (N, S)
  attention_mask = ((1.0 - input_mask) * -1e9)[..., None]                        # (N, S, 1)
  coverage_attn = jax.random.uniform(k4, (N, S, 1), jnp.float32) * 0.1

  ref = reference_forward(params, key_enc, val_enc, dec_state,
                          attention_mask, input_mask, coverage_attn)
  names = ("context_vector", "attention_scores", "key_encoder_states",
           "coverage_attn", "coverage_loss")

  # Exact-precision run (f32 key/value streams): tight tolerance.
  out32 = attention_forward(params, key_enc, val_enc, dec_state,
                            attention_mask, input_mask, coverage_attn,
                            kv_dtype=jnp.float32)
  jax.block_until_ready(out32)
  for name in names:
    assert out32[name].shape == ref[name].shape, name
    assert jnp.allclose(out32[name], ref[name], rtol=2e-3, atol=2e-3), name

  # Default perf configuration (bf16 key/value streams): looser tolerance.
  out = attention_forward(params, key_enc, val_enc, dec_state,
                          attention_mask, input_mask, coverage_attn)
  jax.block_until_ready(out)
  for name in names:
    assert out[name].shape == ref[name].shape, name
    assert jnp.allclose(out[name], ref[name], rtol=5e-2, atol=5e-2), name
  assert bool(jnp.all(out["attention_scores"] <= 1.0 + 1e-5))

  print("KERNEL_OK")
</pallas_src>

<mosaic_0001>
module attributes {stable_mosaic.version = 11 : i64} {
  func.func @_attention_kernel(%arg0: i32, %arg1: memref<8x8x32xf32, #tpu.memory_space<vmem>>, %arg2: memref<8x8x32xf32, #tpu.memory_space<vmem>>, %arg3: memref<8x8xf32, #tpu.memory_space<vmem>>, %arg4: memref<8x8xf32, #tpu.memory_space<vmem>>, %arg5: memref<8x8x1xf32, #tpu.memory_space<vmem>>, %arg6: memref<8x65xf32, #tpu.memory_space<vmem>>, %arg7: memref<32x128xf32, #tpu.memory_space<vmem>>, %arg8: memref<32x128xf32, #tpu.memory_space<vmem>>, %arg9: memref<2x32xf32, #tpu.memory_space<vmem>>, %arg10: memref<8x32xf32, #tpu.memory_space<vmem>>, %arg11: memref<8x8xf32, #tpu.memory_space<vmem>>, %arg12: memref<8x8x32xf32, #tpu.memory_space<vmem>>) attributes {dimension_semantics = [#tpu.dimension_semantics<parallel>], iteration_bounds = array<i64: 1>, scalar_prefetch = 0 : i64, scratch_operands = 0 : i64, tpu.core_type = #tpu.core_type<tc>, window_params = [{transform_indices = @transform_0, window_bounds = array<i64: 8, 8, 32>}, {transform_indices = @transform_1, window_bounds = array<i64: 8, 8, 32>}, {transform_indices = @transform_2, window_bounds = array<i64: 8, 8>}, {transform_indices = @transform_3, window_bounds = array<i64: 8, 8>}, {transform_indices = @transform_4, window_bounds = array<i64: 8, 8, 1>}, {transform_indices = @transform_5, window_bounds = array<i64: 8, 65>}, {pipeline_mode = #tpu.pipeline_mode<synchronous>, transform_indices = @transform_6, window_bounds = array<i64: 32, 128>}, {pipeline_mode = #tpu.pipeline_mode<synchronous>, transform_indices = @transform_7, window_bounds = array<i64: 32, 128>}, {pipeline_mode = #tpu.pipeline_mode<synchronous>, transform_indices = @transform_8, window_bounds = array<i64: 2, 32>}, {transform_indices = @transform_9, window_bounds = array<i64: 8, 32>}, {transform_indices = @transform_10, window_bounds = array<i64: 8, 8>}, {transform_indices = @transform_11, window_bounds = array<i64: 8, 8, 32>}]} {
    %c0 = arith.constant 0 : index
    %c0_0 = arith.constant 0 : index
    %c0_1 = arith.constant 0 : index
    %0 = vector.load %arg1[%c0, %c0_0, %c0_1] : memref<8x8x32xf32, #tpu.memory_space<vmem>>, vector<8x8x32xf32>
    %1 = vector.shape_cast %0 : vector<8x8x32xf32> to vector<64x32xf32>
    %c0_2 = arith.constant 0 : index
    %c0_3 = arith.constant 0 : index
    %2 = vector.load %arg7[%c0_2, %c0_3] : memref<32x128xf32, #tpu.memory_space<vmem>>, vector<32x128xf32>
    %cst = arith.constant dense<0.000000e+00> : vector<64x128xf32>
    %3 = tpu.matmul %1, %2, %cst {dimension_numbers = #tpu.dot_dimension_numbers<[1], [0], [0], [1], [0, 0, 1, 1], [], []>} : vector<64x32xf32>, vector<32x128xf32>, vector<64x128xf32> -> vector<64x128xf32>
    %4 = vector.shape_cast %3 : vector<64x128xf32> to vector<8x8x128xf32>
    %5 = vector.extract_strided_slice %4 {offsets = [0, 0, 0], sizes = [8, 8, 32], strides = [1, 1, 1]} : vector<8x8x128xf32> to vector<8x8x32xf32>
    %6 = vector.extract_strided_slice %4 {offsets = [0, 0, 32], sizes = [8, 8, 1], strides = [1, 1, 1]} : vector<8x8x128xf32> to vector<8x8x1xf32>
    %c0_4 = arith.constant 0 : index
    %c0_5 = arith.constant 0 : index
    %7 = vector.load %arg6[%c0_4, %c0_5] : memref<8x65xf32, #tpu.memory_space<vmem>>, vector<8x65xf32>
    %8 = vector.extract_strided_slice %7 {offsets = [0, 0], sizes = [8, 32], strides = [1, 1]} : vector<8x65xf32> to vector<8x32xf32>
    %9 = vector.extract_strided_slice %7 {offsets = [0, 32], sizes = [8, 32], strides = [1, 1]} : vector<8x65xf32> to vector<8x32xf32>
    %10 = vector.extract_strided_slice %7 {offsets = [0, 64], sizes = [8, 1], strides = [1, 1]} : vector<8x65xf32> to vector<8x1xf32>
    %c0_6 = arith.constant 0 : index
    %c0_7 = arith.constant 0 : index
    %11 = vector.load %arg9[%c0_6, %c0_7] : memref<2x32xf32, #tpu.memory_space<vmem>>, vector<2x32xf32>
    %12 = vector.extract_strided_slice %11 {offsets = [0, 0], sizes = [1, 32], strides = [1, 1]} : vector<2x32xf32> to vector<1x32xf32>
    %13 = vector.extract_strided_slice %11 {offsets = [1, 0], sizes = [1, 32], strides = [1, 1]} : vector<2x32xf32> to vector<1x32xf32>
    %14 = vector.shape_cast %8 : vector<8x32xf32> to vector<8x1x32xf32>
    %15 = vector.broadcast %14 : vector<8x1x32xf32> to vector<8x8x32xf32>
    %16 = arith.addf %5, %15 : vector<8x8x32xf32>
    %c0_8 = arith.constant 0 : index
    %c0_9 = arith.constant 0 : index
    %c0_10 = arith.constant 0 : index
    %17 = vector.load %arg5[%c0_8, %c0_9, %c0_10] : memref<8x8x1xf32, #tpu.memory_space<vmem>>, vector<8x8x1xf32>
    %18 = vector.shape_cast %12 : vector<1x32xf32> to vector<1x1x32xf32>
    %19 = vector.broadcast %17 : vector<8x8x1xf32> to vector<8x8x32xf32>
    %20 = vector.broadcast %18 : vector<1x1x32xf32> to vector<8x8x32xf32>
    %21 = arith.mulf %19, %20 : vector<8x8x32xf32>
    %22 = arith.addf %16, %21 : vector<8x8x32xf32>
    %23 = math.tanh %22 : vector<8x8x32xf32>
    %24 = vector.shape_cast %13 : vector<1x32xf32> to vector<1x1x32xf32>
    %25 = vector.broadcast %24 : vector<1x1x32xf32> to vector<8x8x32xf32>
    %26 = arith.mulf %23, %25 : vector<8x8x32xf32>
    %cst_11 = arith.constant dense<0.000000e+00> : vector<8x8xf32>
    %27 = vector.multi_reduction <add>, %26, %cst_11 [2] : vector<8x8x32xf32> to vector<8x8xf32>
    %c0_12 = arith.constant 0 : index
    %c0_13 = arith.constant 0 : index
    %28 = vector.load %arg3[%c0_12, %c0_13] : memref<8x8xf32, #tpu.memory_space<vmem>>, vector<8x8xf32>
    %29 = arith.addf %27, %28 : vector<8x8xf32>
    %cst_14 = arith.constant dense<0xFF800000> : vector<8xf32>
    %30 = vector.multi_reduction <maximumf>, %29, %cst_14 [1] : vector<8x8xf32> to vector<8xf32>
    %31 = vector.shape_cast %30 : vector<8xf32> to vector<8x1xf32>
    %32 = vector.broadcast %31 : vector<8x1xf32> to vector<8x8xf32>
    %33 = arith.subf %29, %32 : vector<8x8xf32>
    %34 = math.exp %33 : vector<8x8xf32>
    %cst_15 = arith.constant dense<0.000000e+00> : vector<8xf32>
    %35 = vector.multi_reduction <add>, %34, %cst_15 [1] : vector<8x8xf32> to vector<8xf32>
    %36 = vector.shape_cast %35 : vector<8xf32> to vector<8x1xf32>
    %37 = vector.broadcast %36 : vector<8x1xf32> to vector<8x8xf32>
    %38 = arith.divf %34, %37 : vector<8x8xf32>
    %c0_16 = arith.constant 0 : index
    %c0_17 = arith.constant 0 : index
    %39 = vector.load %arg4[%c0_16, %c0_17] : memref<8x8xf32, #tpu.memory_space<vmem>>, vector<8x8xf32>
    %40 = arith.mulf %38, %39 : vector<8x8xf32>
    %c0_18 = arith.constant 0 : index
    %c0_19 = arith.constant 0 : index
    %c0_20 = arith.constant 0 : index
    %41 = vector.load %arg2[%c0_18, %c0_19, %c0_20] : memref<8x8x32xf32, #tpu.memory_space<vmem>>, vector<8x8x32xf32>
    %42 = vector.shape_cast %40 : vector<8x8xf32> to vector<8x1x8xf32>
    %cst_21 = arith.constant dense<0.000000e+00> : vector<8x1x32xf32>
    %43 = tpu.matmul %42, %41, %cst_21 {dimension_numbers = #tpu.dot_dimension_numbers<[2], [1], [1], [2], [0, 0, 0, 1, 1, 2], [0], [0]>} : vector<8x1x8xf32>, vector<8x8x32xf32>, vector<8x1x32xf32> -> vector<8x1x32xf32>
    %44 = vector.shape_cast %43 : vector<8x1x32xf32> to vector<8x32xf32>
    %c0_22 = arith.constant 0 : index
    %c0_23 = arith.constant 0 : index
    %45 = vector.load %arg8[%c0_22, %c0_23] : memref<32x128xf32, #tpu.memory_space<vmem>>, vector<32x128xf32>
    %cst_24 = arith.constant dense<0.000000e+00> : vector<8x128xf32>
    %46 = tpu.matmul %44, %45, %cst_24 {dimension_numbers = #tpu.dot_dimension_numbers<[1], [0], [0], [1], [0, 0, 1, 1], [], []>} : vector<8x32xf32>, vector<32x128xf32>, vector<8x128xf32> -> vector<8x128xf32>
    %47 = vector.extract_strided_slice %46 {offsets = [0, 0], sizes = [8, 32], strides = [1, 1]} : vector<8x128xf32> to vector<8x32xf32>
    %48 = arith.addf %47, %9 : vector<8x32xf32>
    %49 = math.tanh %48 : vector<8x32xf32>
    %50 = vector.extract_strided_slice %46 {offsets = [0, 32], sizes = [8, 1], strides = [1, 1]} : vector<8x128xf32> to vector<8x1xf32>
    %51 = arith.addf %50, %10 : vector<8x1xf32>
    %52 = vector.shape_cast %51 : vector<8x1xf32> to vector<8x1x1xf32>
    %53 = vector.broadcast %52 : vector<8x1x1xf32> to vector<8x8x1xf32>
    %54 = arith.addf %6, %53 : vector<8x8x1xf32>
    %55 = arith.negf %54 : vector<8x8x1xf32>
    %56 = math.exp %55 : vector<8x8x1xf32>
    %cst_25 = arith.constant 1.000000e+00 : f32
    %57 = vector.broadcast %cst_25 : f32 to vector<8x8x1xf32>
    %58 = arith.addf %57, %56 : vector<8x8x1xf32>
    %59 = arith.divf %57, %58 : vector<8x8x1xf32>
    %60 = vector.broadcast %59 : vector<8x8x1xf32> to vector<8x8x32xf32>
    %61 = arith.mulf %60, %0 : vector<8x8x32xf32>
    %cst_26 = arith.constant 1.000000e+00 : f32
    %62 = vector.broadcast %cst_26 : f32 to vector<8x8x1xf32>
    %63 = arith.subf %62, %59 : vector<8x8x1xf32>
    %64 = vector.shape_cast %49 : vector<8x32xf32> to vector<8x1x32xf32>
    %65 = vector.broadcast %63 : vector<8x8x1xf32> to vector<8x8x32xf32>
    %66 = vector.broadcast %64 : vector<8x1x32xf32> to vector<8x8x32xf32>
    %67 = arith.mulf %65, %66 : vector<8x8x32xf32>
    %68 = arith.addf %61, %67 : vector<8x8x32xf32>
    %c0_27 = arith.constant 0 : index
    %c0_28 = arith.constant 0 : index
    %69 = vector.load %arg10[%c0_27, %c0_28] : memref<8x32xf32, #tpu.memory_space<vmem>>, vector<8x32xf32>
    tpu.vector_store %arg10[%c0_27, %c0_28], %44 {strides = array<i32>} : memref<8x32xf32, #tpu.memory_space<vmem>>, vector<8x32xf32>,
    %c0_29 = arith.constant 0 : index
    %c0_30 = arith.constant 0 : index
    %70 = vector.load %arg11[%c0_29, %c0_30] : memref<8x8xf32, #tpu.memory_space<vmem>>, vector<8x8xf32>
    tpu.vector_store %arg11[%c0_29, %c0_30], %40 {strides = array<i32>} : memref<8x8xf32, #tpu.memory_space<vmem>>, vector<8x8xf32>,
    %c0_31 = arith.constant 0 : index
    %c0_32 = arith.constant 0 : index
    %c0_33 = arith.constant 0 : index
    %71 = vector.load %arg12[%c0_31, %c0_32, %c0_33] : memref<8x8x32xf32, #tpu.memory_space<vmem>>, vector<8x8x32xf32>
    tpu.vector_store %arg12[%c0_31, %c0_32, %c0_33], %68 {strides = array<i32>} : memref<8x8x32xf32, #tpu.memory_space<vmem>>, vector<8x8x32xf32>,
    return
  }
  func.func @transform_0(%arg0: i32) -> (i32, i32, i32) {
    %c0_i32 = arith.constant 0 : i32
    %c0_i32_0 = arith.constant 0 : i32
    %c0_i32_1 = arith.constant 0 : i32
    return %arg0, %c0_i32, %c0_i32_0 : i32, i32, i32
  }
  func.func @transform_1(%arg0: i32) -> (i32, i32, i32) {
    %c0_i32 = arith.constant 0 : i32
    %c0_i32_0 = arith.constant 0 : i32
    %c0_i32_1 = arith.constant 0 : i32
    return %arg0, %c0_i32, %c0_i32_0 : i32, i32, i32
  }
  func.func @transform_2(%arg0: i32) -> (i32, i32) {
    %c0_i32 = arith.constant 0 : i32
    %c0_i32_0 = arith.constant 0 : i32
    return %arg0, %c0_i32 : i32, i32
  }
  func.func @transform_3(%arg0: i32) -> (i32, i32) {
    %c0_i32 = arith.constant 0 : i32
    %c0_i32_0 = arith.constant 0 : i32
    return %arg0, %c0_i32 : i32, i32
  }
  func.func @transform_4(%arg0: i32) -> (i32, i32, i32) {
    %c0_i32 = arith.constant 0 : i32
    %c0_i32_0 = arith.constant 0 : i32
    %c0_i32_1 = arith.constant 0 : i32
    return %arg0, %c0_i32, %c0_i32_0 : i32, i32, i32
  }
  func.func @transform_5(%arg0: i32) -> (i32, i32) {
    %c0_i32 = arith.constant 0 : i32
    %c0_i32_0 = arith.constant 0 : i32
    return %arg0, %c0_i32 : i32, i32
  }
  func.func @transform_6(%arg0: i32) -> (i32, i32) {
    %c0_i32 = arith.constant 0 : i32
    %c0_i32_0 = arith.constant 0 : i32
    %c0_i32_1 = arith.constant 0 : i32
    return %c0_i32, %c0_i32_0 : i32, i32
  }
  func.func @transform_7(%arg0: i32) -> (i32, i32) {
    %c0_i32 = arith.constant 0 : i32
    %c0_i32_0 = arith.constant 0 : i32
    %c0_i32_1 = arith.constant 0 : i32
    return %c0_i32, %c0_i32_0 : i32, i32
  }
  func.func @transform_8(%arg0: i32) -> (i32, i32) {
    %c0_i32 = arith.constant 0 : i32
    %c0_i32_0 = arith.constant 0 : i32
    %c0_i32_1 = arith.constant 0 : i32
    return %c0_i32, %c0_i32_0 : i32, i32
  }
  func.func @transform_9(%arg0: i32) -> (i32, i32) {
    %c0_i32 = arith.constant 0 : i32
    %c0_i32_0 = arith.constant 0 : i32
    return %arg0, %c0_i32 : i32, i32
  }
  func.func @transform_10(%arg0: i32) -> (i32, i32) {
    %c0_i32 = arith.constant 0 : i32
    %c0_i32_0 = arith.constant 0 : i32
    return %arg0, %c0_i32 : i32, i32
  }
  func.func @transform_11(%arg0: i32) -> (i32, i32, i32) {
    %c0_i32 = arith.constant 0 : i32
    %c0_i32_0 = arith.constant 0 : i32
    %c0_i32_1 = arith.constant 0 : i32
    return %arg0, %c0_i32, %c0_i32_0 : i32, i32, i32
  }
}

</mosaic_0001>

<llo_original>
// kernel: tpu_custom_call.1
$region0: #{tpu_custom_call.1}
  #allocation0 [shape = 'u32[]', space=smem, size = 0x4, offset = 0x4, fixed_abs, tag = 'smem constant byte address 0x4 - core index']
  #allocation1 [shape = 'u32[72,128]{1,0:T(1,128)}', space=vmem, size = 0x9000, scoped, tag = 'internal scratch']
  %s0 = inlined_call_operand.vmem [shape: f32[8,8,32], index: 0, kind: input, shape index: {}]
  %s1 = inlined_call_operand.hbm [shape: f32[8,8,32], index: 1, kind: input, shape index: {}]
  %s2 = inlined_call_operand.vmem [shape: f32[8,8], index: 2, kind: input, shape index: {}]
  %s3 = inlined_call_operand.hbm [shape: f32[8,8], index: 3, kind: input, shape index: {}]
  %s4 = inlined_call_operand.vmem [shape: f32[8,8,1], index: 4, kind: input, shape index: {}]
  %s5 = inlined_call_operand.hbm [shape: f32[8,65], index: 5, kind: input, shape index: {}]
  %s6 = inlined_call_operand.hbm [shape: f32[32,128], index: 6, kind: input, shape index: {}]
  %s7 = inlined_call_operand.hbm [shape: f32[32,128], index: 7, kind: input, shape index: {}]
  %s8 = inlined_call_operand.vmem [shape: f32[2,32], index: 8, kind: input, shape index: {}]
  %s9 = inlined_call_operand.hbm [shape: f32[8,32], index: 9, kind: output, shape index: {0}]
  %s10 = inlined_call_operand.hbm [shape: f32[8,8], index: 10, kind: output, shape index: {1}]
  %s11 = inlined_call_operand.hbm [shape: f32[8,8,32], index: 11, kind: output, shape index: {2}]
  %12 = xla_tuple %s9, %s10, %s11
  %s13 = sld [smem:[#allocation0]]
  $region82: #{tpu_custom_call.1} parent=0
    _
  %s15 = ssub.s32 1, %s13
  %s16 = scalar_select 0, %s15, %s13
  $region1: #{tpu_custom_call.1} parent=0
    #allocation2 [shape = 'u8[32768]{0}', space=vmem, size = 0x8000, scoped, tag = 'input window, operand 1, single buffered']
    #allocation3 [shape = 's32[1]{0}', space=sflag, size = 0x4, scoped, tag = 'scoped memory for tpu_custom_call.1']
    #allocation4 [shape = 's32[1]{0}', space=sflag, size = 0x4, scoped, tag = 'scoped memory for tpu_custom_call.1']
    #allocation5 [shape = 'u8[4096]{0}', space=vmem, size = 0x1000, scoped, tag = 'input window, operand 3, single buffered']
    #allocation6 [shape = 's32[1]{0}', space=sflag, size = 0x4, scoped, tag = 'scoped memory for tpu_custom_call.1']
    #allocation7 [shape = 'u8[4096]{0}', space=vmem, size = 0x1000, scoped, tag = 'input window, operand 5, single buffered']
    #allocation8 [shape = 'u8[16384]{0}', space=vmem, size = 0x4000, scoped, tag = 'input window, operand 6, single buffered']
    #allocation9 [shape = 's32[1]{0}', space=sflag, size = 0x4, scoped, tag = 'scoped memory for tpu_custom_call.1']
    #allocation10 [shape = 'u8[16384]{0}', space=vmem, size = 0x4000, scoped, tag = 'input window, operand 7, single buffered']
    #allocation11 [shape = 'u8[4096]{0}', space=vmem, size = 0x1000, scoped, tag = 'output window, operand 0, single buffered']
    #allocation12 [shape = 'u8[4096]{0}', space=vmem, size = 0x1000, scoped, tag = 'output window, operand 1, single buffered']
    #allocation13 [shape = 's32[1]{0}', space=sflag, size = 0x4, scoped, tag = 'scoped memory for tpu_custom_call.1']
    #allocation14 [shape = 'u8[32768]{0}', space=vmem, size = 0x8000, scoped, tag = 'output window, operand 2, single buffered']
    %17 = vsyncpa [#allocation3], 0
    %18 = vsyncpa [#allocation6], 0
    %19 = vsyncpa [#allocation9], 0
    %20 = vsyncpa [#allocation4], 0
    %21 = vsyncpa [#allocation13], 0
    // Predicated region
    $region2: #{tpu_custom_call.1} parent=1 // pred_check
      _
    $region3: #{tpu_custom_call.1} parent=1 // pred_check_branch
      %23 = sbr.rel (0) target = $region5
    $region4: #{tpu_custom_call.1} parent=1 // pred_region
      _
    $region5: #{tpu_custom_call.1} parent=1 // pred_fallthru
      _
    // Predicated region
    $region6: #{tpu_custom_call.1} parent=1 // pred_check
      _
    $region7: #{tpu_custom_call.1} parent=1 // pred_check_branch
      %25 = sbr.rel (0) target = $region9
    $region8: #{tpu_custom_call.1} parent=1 // pred_region
      %27 = vsyncadd [#allocation3], 0
      %s28 = sshll.u32 %s1, 4
      %s29 = int_to_ptr.hbm [resolvable:$true] %s28
      %s30 = sshll.u32 [#allocation2], 4
      %s31 = int_to_ptr.vmem [resolvable:$true] %s30
      %36 = dma.hbm_to_vmem [thread:$0]  %s29, 1024, %s31, [#allocation3], 128, 128, 8
    $region9: #{tpu_custom_call.1} parent=1 // pred_fallthru
      _
    // Predicated region
    $region10: #{tpu_custom_call.1} parent=1 // pred_check
      _
    $region11: #{tpu_custom_call.1} parent=1 // pred_check_branch
      %38 = sbr.rel (0) target = $region13
    $region12: #{tpu_custom_call.1} parent=1 // pred_region
      _
    $region13: #{tpu_custom_call.1} parent=1 // pred_fallthru
      _
    // Predicated region
    $region14: #{tpu_custom_call.1} parent=1 // pred_check
      _
    $region15: #{tpu_custom_call.1} parent=1 // pred_check_branch
      %40 = sbr.rel (0) target = $region17
    $region16: #{tpu_custom_call.1} parent=1 // pred_region
      %42 = vsyncadd [#allocation6], 0
      %s44 = sshll.u32 %s3, 4
      %s45 = int_to_ptr.hbm [resolvable:$true] %s44
      %s46 = sshll.u32 [#allocation5], 4
      %s47 = int_to_ptr.vmem [resolvable:$true] %s46
      %49 = dma.hbm_to_vmem [thread:$0]  %s45, 128, %s47, [#allocation6]
    $region17: #{tpu_custom_call.1} parent=1 // pred_fallthru
      _
    // Predicated region
    $region18: #{tpu_custom_call.1} parent=1 // pred_check
      _
    $region19: #{tpu_custom_call.1} parent=1 // pred_check_branch
      %51 = sbr.rel (0) target = $region21
    $region20: #{tpu_custom_call.1} parent=1 // pred_region
      _
    $region21: #{tpu_custom_call.1} parent=1 // pred_fallthru
      _
    // Predicated region
    $region22: #{tpu_custom_call.1} parent=1 // pred_check
      _
    $region23: #{tpu_custom_call.1} parent=1 // pred_check_branch
      %53 = sbr.rel (0) target = $region25
    $region24: #{tpu_custom_call.1} parent=1 // pred_region
      %55 = vsyncadd [#allocation6], 0
      %s57 = sshll.u32 %s5, 4
      %s58 = int_to_ptr.hbm [resolvable:$true] %s57
      %s59 = sshll.u32 [#allocation7], 4
      %s60 = int_to_ptr.vmem [resolvable:$true] %s59
      %62 = dma.hbm_to_vmem [thread:$0]  %s58, 128, %s60, [#allocation6]
    $region25: #{tpu_custom_call.1} parent=1 // pred_fallthru
      _
    // Predicated region
    $region26: #{tpu_custom_call.1} parent=1 // pred_check
      _
    $region27: #{tpu_custom_call.1} parent=1 // pred_check_branch
      %64 = sbr.rel (0) target = $region29
    $region28: #{tpu_custom_call.1} parent=1 // pred_region
      %66 = vsyncadd [#allocation9], 0
      %s67 = sshll.u32 %s6, 4
      %s68 = int_to_ptr.hbm [resolvable:$true] %s67
      %s69 = sshll.u32 [#allocation8], 4
      %s70 = int_to_ptr.vmem [resolvable:$true] %s69
      %75 = dma.hbm_to_vmem [thread:$0]  %s68, 512, %s70, [#allocation9], 128, 128, 8
    $region29: #{tpu_custom_call.1} parent=1 // pred_fallthru
      _
    // Predicated region
    $region30: #{tpu_custom_call.1} parent=1 // pred_check
      _
    $region31: #{tpu_custom_call.1} parent=1 // pred_check_branch
      %77 = sbr.rel (0) target = $region33
    $region32: #{tpu_custom_call.1} parent=1 // pred_region
      %79 = vsyncadd [#allocation9], 0
      %s80 = sshll.u32 %s7, 4
      %s81 = int_to_ptr.hbm [resolvable:$true] %s80
      %s82 = sshll.u32 [#allocation10], 4
      %s83 = int_to_ptr.vmem [resolvable:$true] %s82
      %88 = dma.hbm_to_vmem [thread:$0]  %s81, 512, %s83, [#allocation9], 128, 128, 8
    $region33: #{tpu_custom_call.1} parent=1 // pred_fallthru
      _
    // Predicated region
    $region34: #{tpu_custom_call.1} parent=1 // pred_check
      _
    $region35: #{tpu_custom_call.1} parent=1 // pred_check_branch
      %90 = sbr.rel (0) target = $region37
    $region36: #{tpu_custom_call.1} parent=1 // pred_region
      _
    $region37: #{tpu_custom_call.1} parent=1 // pred_fallthru
      _
    // Predicated region
    $region38: #{tpu_custom_call.1} parent=1 // pred_check
      _
    $region39: #{tpu_custom_call.1} parent=1 // pred_check_branch
      %92 = sbr.rel (0) target = $region41
    $region40: #{tpu_custom_call.1} parent=1 // pred_region
      %94 = dma.done [#allocation3], 1024
    $region41: #{tpu_custom_call.1} parent=1 // pred_fallthru
      _
    // Predicated region
    $region42: #{tpu_custom_call.1} parent=1 // pred_check
      _
    $region43: #{tpu_custom_call.1} parent=1 // pred_check_branch
      %96 = sbr.rel (0) target = $region45
    $region44: #{tpu_custom_call.1} parent=1 // pred_region
      %98 = dma.done [#allocation6], 128
    $region45: #{tpu_custom_call.1} parent=1 // pred_fallthru
      _
    // Predicated region
    $region46: #{tpu_custom_call.1} parent=1 // pred_check
      _
    $region47: #{tpu_custom_call.1} parent=1 // pred_check_branch
      %100 = sbr.rel (0) target = $region49
    $region48: #{tpu_custom_call.1} parent=1 // pred_region
      %102 = dma.done [#allocation6], 128
    $region49: #{tpu_custom_call.1} parent=1 // pred_fallthru
      _
    // Predicated region
    $region50: #{tpu_custom_call.1} parent=1 // pred_check
      _
    $region51: #{tpu_custom_call.1} parent=1 // pred_check_branch
      %104 = sbr.rel (0) target = $region53
    $region52: #{tpu_custom_call.1} parent=1 // pred_region
      %106 = dma.done [#allocation9], 512
    $region53: #{tpu_custom_call.1} parent=1 // pred_fallthru
      _
    // Predicated region
    $region54: #{tpu_custom_call.1} parent=1 // pred_check
      _
    $region55: #{tpu_custom_call.1} parent=1 // pred_check_branch
      %108 = sbr.rel (0) target = $region57
    $region56: #{tpu_custom_call.1} parent=1 // pred_region
      %110 = dma.done [#allocation9], 512
    $region57: #{tpu_custom_call.1} parent=1 // pred_fallthru
      _
    %v111 = vld [vmem:[%s0] sm:$0xff]
    %v112 = vld [vmem:[%s0 + $0x8] sm:$0xff]
    %v113 = vld [vmem:[%s0 + $0x10] sm:$0xff]
    %v114 = vld [vmem:[%s0 + $0x18] sm:$0xff]
    %v115 = vld [vmem:[%s0 + $0x20] sm:$0xff]
    %v116 = vld [vmem:[%s0 + $0x28] sm:$0xff]
    %v117 = vld [vmem:[%s0 + $0x30] sm:$0xff]
    %v118 = vld [vmem:[%s0 + $0x38] sm:$0xff]
    %v119 = vld [vmem:[#allocation8] sm:$0xff]
    %v120 = vld [vmem:[#allocation8 + $0x8] sm:$0xff]
    %v121 = vld [vmem:[#allocation8 + $0x10] sm:$0xff]
    %v122 = vld [vmem:[#allocation8 + $0x18] sm:$0xff]
    %vm123 = vcmask 261120
    %v125 = vsel %vm123, %v111, 0
    %v128 = vsel %vm123, %v112, 0
    %v131 = vsel %vm123, %v113, 0
    %v134 = vsel %vm123, %v114, 0
    %v137 = vsel %vm123, %v115, 0
    %v140 = vsel %vm123, %v116, 0
    %v143 = vsel %vm123, %v117, 0
    %v146 = vsel %vm123, %v118, 0
    %148 = vmatpush.msra.mxu0 0.0
    %149 = vmatpush.msra.mxu0 0.0
    %150 = vmatpush.msra.mxu0 0.0
    %151 = vmatpush.msra.mxu0 0.0
    %152 = vmatpush.msra.mxu0 0.0
    %153 = vmatpush.msra.mxu0 0.0
    %154 = vmatpush.msra.mxu0 0.0
    %155 = vmatpush.msra.mxu0 0.0
    %156 = vmatpush.msra.mxu0 0.0
    %157 = vmatpush.msra.mxu0 0.0
    %158 = vmatpush.msra.mxu0 0.0
    %159 = vmatpush.msra.mxu0 0.0
    %160 = vmatpush.msra.mxu0 %v122
    %161 = vmatpush.msra.mxu0 %v121
    %162 = vmatpush.msra.mxu0 %v120
    %163 = vmatpush.msra.mxu0 %v119
    %164 = vmatmul.f32.gmra.mxu0 %v125
    %v165 = vpop.f32.mrf.mxu0
    %v166 = vadd.f32 0.0, %v165
    %167 = vmatmul.f32.gmra.mxu0 %v128
    %v168 = vpop.f32.mrf.mxu0
    %v169 = vadd.f32 0.0, %v168
    %170 = vmatmul.f32.gmra.mxu0 %v131
    %v171 = vpop.f32.mrf.mxu0
    %v172 = vadd.f32 0.0, %v171
    %173 = vmatmul.f32.gmra.mxu0 %v134
    %v174 = vpop.f32.mrf.mxu0
    %v175 = vadd.f32 0.0, %v174
    %176 = vmatmul.f32.gmra.mxu0 %v137
    %v177 = vpop.f32.mrf.mxu0
    %v178 = vadd.f32 0.0, %v177
    %179 = vmatmul.f32.gmra.mxu0 %v140
    %v180 = vpop.f32.mrf.mxu0
    %v181 = vadd.f32 0.0, %v180
    %182 = vmatmul.f32.gmra.mxu0 %v143
    %v183 = vpop.f32.mrf.mxu0
    %v184 = vadd.f32 0.0, %v183
    %185 = vmatmul.f32.gmra.mxu0 %v146
    %v186 = vpop.f32.mrf.mxu0
    %v187 = vadd.f32 0.0, %v186
    %188 = vdwg.mxu0
    %v189 = vld [vmem:[#allocation7] sm:$0xff]
    %v190 = vld [vmem:[%s8] sm:$0x3]
    %v192 = vrot.slane %v189, 1
    %v193 = vrot.slane %v189, 2
    %v194 = vrot.slane %v189, 3
    %v195 = vrot.slane %v189, 4
    %v196 = vrot.slane %v189, 5
    %v197 = vrot.slane %v189, 6
    %v198 = vrot.slane %v189, 7
    %v199 = vperm.slane %v189, 0
    %v200 = vperm.slane %v192, 0
    %v201 = vperm.slane %v193, 0
    %v202 = vperm.slane %v194, 0
    %v203 = vperm.slane %v195, 0
    %v204 = vperm.slane %v196, 0
    %v205 = vperm.slane %v197, 0
    %v206 = vperm.slane %v198, 0
    %v215 = vadd.f32 %v166, %v199
    %v216 = vadd.f32 %v169, %v200
    %v217 = vadd.f32 %v172, %v201
    %v218 = vadd.f32 %v175, %v202
    %v219 = vadd.f32 %v178, %v203
    %v220 = vadd.f32 %v181, %v204
    %v221 = vadd.f32 %v184, %v205
    %v222 = vadd.f32 %v187, %v206
    %v223 = vld [vmem:[%s4] sm:$0xff]
    %v224 = vld [vmem:[%s4 + $0x8] sm:$0xff]
    %v225 = vld [vmem:[%s4 + $0x10] sm:$0xff]
    %v226 = vld [vmem:[%s4 + $0x18] sm:$0xff]
    %v227 = vld [vmem:[%s4 + $0x20] sm:$0xff]
    %v228 = vld [vmem:[%s4 + $0x28] sm:$0xff]
    %v229 = vld [vmem:[%s4 + $0x30] sm:$0xff]
    %v230 = vld [vmem:[%s4 + $0x38] sm:$0xff]
    %232 = vset.pattern.permute.xlu0 0
    %233 = vperm.xlu0 %232, %v223
    %v234 = vpop.permute.xlu0 %233
    %237 = vset.pattern.permute.xlu0 0
    %238 = vperm.xlu0 %237, %v224
    %v239 = vpop.permute.xlu0 %238
    %242 = vset.pattern.permute.xlu0 0
    %243 = vperm.xlu0 %242, %v225
    %v244 = vpop.permute.xlu0 %243
    %247 = vset.pattern.permute.xlu0 0
    %248 = vperm.xlu0 %247, %v226
    %v249 = vpop.permute.xlu0 %248
    %252 = vset.pattern.permute.xlu0 0
    %253 = vperm.xlu0 %252, %v227
    %v254 = vpop.permute.xlu0 %253
    %257 = vset.pattern.permute.xlu0 0
    %258 = vperm.xlu0 %257, %v228
    %v259 = vpop.permute.xlu0 %258
    %262 = vset.pattern.permute.xlu0 0
    %263 = vperm.xlu0 %262, %v229
    %v264 = vpop.permute.xlu0 %263
    %267 = vset.pattern.permute.xlu0 0
    %268 = vperm.xlu0 %267, %v230
    %v269 = vpop.permute.xlu0 %268
    %v271 = vperm.slane %v190, 0
    %v272 = vmul.f32 %v234, %v271
    %v273 = vmul.f32 %v239, %v271
    %v274 = vmul.f32 %v244, %v271
    %v275 = vmul.f32 %v249, %v271
    %v276 = vmul.f32 %v254, %v271
    %v277 = vmul.f32 %v259, %v271
    %v278 = vmul.f32 %v264, %v271
    %v279 = vmul.f32 %v269, %v271
    %v280 = vadd.f32 %v215, %v272
    %v281 = vadd.f32 %v216, %v273
    %v282 = vadd.f32 %v217, %v274
    %v283 = vadd.f32 %v218, %v275
    %v284 = vadd.f32 %v219, %v276
    %v285 = vadd.f32 %v220, %v277
    %v286 = vadd.f32 %v221, %v278
    %v287 = vadd.f32 %v222, %v279
    %v288 = vtanh.pop %v280
    %v289 = vtanh.pop %v281
    %v290 = vtanh.pop %v282
    %v291 = vtanh.pop %v283
    %v292 = vtanh.pop %v284
    %v293 = vtanh.pop %v285
    %v294 = vtanh.pop %v286
    %v295 = vtanh.pop %v287
    %v296 = vperm.slane %v190, 1
    %v297 = vmul.f32 %v288, %v296
    %v298 = vmul.f32 %v289, %v296
    %v299 = vmul.f32 %v290, %v296
    %v300 = vmul.f32 %v291, %v296
    %v301 = vmul.f32 %v292, %v296
    %v302 = vmul.f32 %v293, %v296
    %v303 = vmul.f32 %v294, %v296
    %v304 = vmul.f32 %v295, %v296
    %v305 = vsel %vm123, %v297, 0.0
    %306 = vadd.xlane.f32.xlu0 %v305
    %v307 = vpop.xlane.xlu0 %306
    %v308 = vsel %vm123, %v298, 0.0
    %309 = vadd.xlane.f32.xlu0 %v308
    %v310 = vpop.xlane.xlu0 %309
    %v311 = vsel %vm123, %v299, 0.0
    %312 = vadd.xlane.f32.xlu0 %v311
    %v313 = vpop.xlane.xlu0 %312
    %v314 = vsel %vm123, %v300, 0.0
    %315 = vadd.xlane.f32.xlu0 %v314
    %v316 = vpop.xlane.xlu0 %315
    %v317 = vsel %vm123, %v301, 0.0
    %318 = vadd.xlane.f32.xlu0 %v317
    %v319 = vpop.xlane.xlu0 %318
    %v320 = vsel %vm123, %v302, 0.0
    %321 = vadd.xlane.f32.xlu0 %v320
    %v322 = vpop.xlane.xlu0 %321
    %v323 = vsel %vm123, %v303, 0.0
    %324 = vadd.xlane.f32.xlu0 %v323
    %v325 = vpop.xlane.xlu0 %324
    %v326 = vsel %vm123, %v304, 0.0
    %327 = vadd.xlane.f32.xlu0 %v326
    %v328 = vpop.xlane.xlu0 %327
    %v329 = vld [vmem:[%s2] sm:$0xff]
    %v331 = vperm.slane %v329, 0
    %v332 = vlaneseq
    %v333 = vshrl.u32 %v332, 7
    %335 = vset.pattern.permute.xlu0 %v333
    %336 = vperm.xlu0 %335, %v331
    %v337 = vpop.permute.xlu0 %336
    %v338 = vperm.slane %v329, 1
    %v339 = vlaneseq
    %v340 = vshrl.u32 %v339, 7
    %342 = vset.pattern.permute.xlu0 %v340
    %343 = vperm.xlu0 %342, %v338
    %v344 = vpop.permute.xlu0 %343
    %v345 = vperm.slane %v329, 2
    %v346 = vlaneseq
    %v347 = vshrl.u32 %v346, 7
    %349 = vset.pattern.permute.xlu0 %v347
    %350 = vperm.xlu0 %349, %v345
    %v351 = vpop.permute.xlu0 %350
    %v352 = vperm.slane %v329, 3
    %v353 = vlaneseq
    %v354 = vshrl.u32 %v353, 7
    %356 = vset.pattern.permute.xlu0 %v354
    %357 = vperm.xlu0 %356, %v352
    %v358 = vpop.permute.xlu0 %357
    %v359 = vperm.slane %v329, 4
    %v360 = vlaneseq
    %v361 = vshrl.u32 %v360, 7
    %363 = vset.pattern.permute.xlu0 %v361
    %364 = vperm.xlu0 %363, %v359
    %v365 = vpop.permute.xlu0 %364
    %v366 = vperm.slane %v329, 5
    %v367 = vlaneseq
    %v368 = vshrl.u32 %v367, 7
    %370 = vset.pattern.permute.xlu0 %v368
    %371 = vperm.xlu0 %370, %v366
    %v372 = vpop.permute.xlu0 %371
    %v373 = vperm.slane %v329, 6
    %v374 = vlaneseq
    %v375 = vshrl.u32 %v374, 7
    %377 = vset.pattern.permute.xlu0 %v375
    %378 = vperm.xlu0 %377, %v373
    %v379 = vpop.permute.xlu0 %378
    %v380 = vperm.slane %v329, 7
    %v381 = vlaneseq
    %v382 = vshrl.u32 %v381, 7
    %384 = vset.pattern.permute.xlu0 %v382
    %385 = vperm.xlu0 %384, %v380
    %v386 = vpop.permute.xlu0 %385
    %v395 = vadd.f32 %v307, %v337
    %v396 = vadd.f32 %v310, %v344
    %v397 = vadd.f32 %v313, %v351
    %v398 = vadd.f32 %v316, %v358
    %v399 = vadd.f32 %v319, %v365
    %v400 = vadd.f32 %v322, %v372
    %v401 = vadd.f32 %v325, %v379
    %v402 = vadd.f32 %v328, %v386
    %411 = vset.pattern.permute.xlu0 0
    %412 = vperm.xlu0 %411, %v395
    %v413 = vpop.permute.xlu0 %412
    %414 = vset.pattern.permute.xlu0 0
    %415 = vperm.xlu0 %414, %v396
    %v416 = vpop.permute.xlu0 %415
    %417 = vset.pattern.permute.xlu0 0
    %418 = vperm.xlu0 %417, %v397
    %v419 = vpop.permute.xlu0 %418
    %420 = vset.pattern.permute.xlu0 0
    %421 = vperm.xlu0 %420, %v398
    %v422 = vpop.permute.xlu0 %421
    %423 = vset.pattern.permute.xlu0 0
    %424 = vperm.xlu0 %423, %v399
    %v425 = vpop.permute.xlu0 %424
    %426 = vset.pattern.permute.xlu0 0
    %427 = vperm.xlu0 %426, %v400
    %v428 = vpop.permute.xlu0 %427
    %429 = vset.pattern.permute.xlu0 0
    %430 = vperm.xlu0 %429, %v401
    %v431 = vpop.permute.xlu0 %430
    %432 = vset.pattern.permute.xlu0 0
    %433 = vperm.xlu0 %432, %v402
    %v434 = vpop.permute.xlu0 %433
    %v435 = vlaneseq
    %v436 = vand.u32 %v435, 127
    %v437 = vperm.slane %v413, %v436
    %v438 = vperm.slane %v416, %v436
    %v439 = vperm.slane %v419, %v436
    %v440 = vperm.slane %v422, %v436
    %v441 = vperm.slane %v425, %v436
    %v442 = vperm.slane %v428, %v436
    %v443 = vperm.slane %v431, %v436
    %v444 = vperm.slane %v434, %v436
    %vm445 = vcmask 1041409
    %v446 = vsel %vm445, %v438, %v437
    %vm447 = vcmask 1042434
    %v448 = vsel %vm447, %v439, %v446
    %vm449 = vcmask 1043459
    %v450 = vsel %vm449, %v440, %v448
    %vm451 = vcmask 1044484
    %v452 = vsel %vm451, %v441, %v450
    %vm453 = vcmask 1045509
    %v454 = vsel %vm453, %v442, %v452
    %vm455 = vcmask 1046534
    %v456 = vsel %vm455, %v443, %v454
    %vm457 = vcmask 1047559
    %v458 = vsel %vm457, %v444, %v456
    %vm460 = vcmask 64512
    %v461 = vsel %vm460, %v458, -inf
    %462 = vmax.xlane.f32.xlu0 %v461
    %v463 = vpop.xlane.xlu0 %462
    %v465 = vperm.slane %v463, 0
    %v466 = vperm.slane %v463, 1
    %v467 = vperm.slane %v463, 2
    %v468 = vperm.slane %v463, 3
    %v469 = vperm.slane %v463, 4
    %v470 = vperm.slane %v463, 5
    %v471 = vperm.slane %v463, 6
    %v472 = vperm.slane %v463, 7
    %v481 = vsub.f32 %v395, %v465
    %v482 = vsub.f32 %v396, %v466
    %v483 = vsub.f32 %v397, %v467
    %v484 = vsub.f32 %v398, %v468
    %v485 = vsub.f32 %v399, %v469
    %v486 = vsub.f32 %v400, %v470
    %v487 = vsub.f32 %v401, %v471
    %v488 = vsub.f32 %v402, %v472
    %v489 = vmul.f32 %v481, 1.442695
    %v490 = vpow.pop %v489
    %v491 = vmul.f32 %v482, 1.442695
    %v492 = vpow.pop %v491
    %v493 = vmul.f32 %v483, 1.442695
    %v494 = vpow.pop %v493
    %v495 = vmul.f32 %v484, 1.442695
    %v496 = vpow.pop %v495
    %v497 = vmul.f32 %v485, 1.442695
    %v498 = vpow.pop %v497
    %v499 = vmul.f32 %v486, 1.442695
    %v500 = vpow.pop %v499
    %v501 = vmul.f32 %v487, 1.442695
    %v502 = vpow.pop %v501
    %v503 = vmul.f32 %v488, 1.442695
    %v504 = vpow.pop %v503
    %513 = vset.pattern.permute.xlu0 0
    %514 = vperm.xlu0 %513, %v490
    %v515 = vpop.permute.xlu0 %514
    %516 = vset.pattern.permute.xlu0 0
    %517 = vperm.xlu0 %516, %v492
    %v518 = vpop.permute.xlu0 %517
    %519 = vset.pattern.permute.xlu0 0
    %520 = vperm.xlu0 %519, %v494
    %v521 = vpop.permute.xlu0 %520
    %522 = vset.pattern.permute.xlu0 0
    %523 = vperm.xlu0 %522, %v496
    %v524 = vpop.permute.xlu0 %523
    %525 = vset.pattern.permute.xlu0 0
    %526 = vperm.xlu0 %525, %v498
    %v527 = vpop.permute.xlu0 %526
    %528 = vset.pattern.permute.xlu0 0
    %529 = vperm.xlu0 %528, %v500
    %v530 = vpop.permute.xlu0 %529
    %531 = vset.pattern.permute.xlu0 0
    %532 = vperm.xlu0 %531, %v502
    %v533 = vpop.permute.xlu0 %532
    %534 = vset.pattern.permute.xlu0 0
    %535 = vperm.xlu0 %534, %v504
    %v536 = vpop.permute.xlu0 %535
    %v537 = vperm.slane %v515, %v436
    %v538 = vperm.slane %v518, %v436
    %v539 = vperm.slane %v521, %v436
    %v540 = vperm.slane %v524, %v436
    %v541 = vperm.slane %v527, %v436
    %v542 = vperm.slane %v530, %v436
    %v543 = vperm.slane %v533, %v436
    %v544 = vperm.slane %v536, %v436
    %v545 = vsel %vm445, %v538, %v537
    %v546 = vsel %vm447, %v539, %v545
    %v547 = vsel %vm449, %v540, %v546
    %v548 = vsel %vm451, %v541, %v547
    %v549 = vsel %vm453, %v542, %v548
    %v550 = vsel %vm455, %v543, %v549
    %v551 = vsel %vm457, %v544, %v550
    %v553 = vsel %vm460, %v551, 0.0
    %554 = vadd.xlane.f32.xlu0 %v553
    %v555 = vpop.xlane.xlu0 %554
    %v557 = vperm.slane %v555, 0
    %v558 = vperm.slane %v555, 1
    %v559 = vperm.slane %v555, 2
    %v560 = vperm.slane %v555, 3
    %v561 = vperm.slane %v555, 4
    %v562 = vperm.slane %v555, 5
    %v563 = vperm.slane %v555, 6
    %v564 = vperm.slane %v555, 7
    %v573 = vrcp.pop %v557
    %v574 = vmul.f32 %v557, %v573
    %v575 = vsub.f32 1.0, %v574
    %v576 = vmul.f32 %v573, %v575
    %v577 = vadd.f32 %v573, %v576
    %vm578 = vweird.f32 %v557
    %vm579 = vweird.f32 %v573
    %vm580 = vmor %vm578, %vm579
    %v581 = vsel %vm580, %v573, %v577
    %v582 = vand.u32 2147483647, %v557
    %vm583 = vcmp.eq.f32.partialorder %v582, 8.507059e+37
    %v584 = vand.u32 %v557, 2147483648
    %v585 = vor.u32 1.1754944e-38, %v584
    %v586 = vsel %vm583, %v585, %v581
    %v587 = vmul.f32 %v490, %v586
    %v588 = vrcp.pop %v558
    %v589 = vmul.f32 %v558, %v588
    %v590 = vsub.f32 1.0, %v589
    %v591 = vmul.f32 %v588, %v590
    %v592 = vadd.f32 %v588, %v591
    %vm593 = vweird.f32 %v558
    %vm594 = vweird.f32 %v588
    %vm595 = vmor %vm593, %vm594
    %v596 = vsel %vm595, %v588, %v592
    %v597 = vand.u32 2147483647, %v558
    %vm598 = vcmp.eq.f32.partialorder %v597, 8.507059e+37
    %v599 = vand.u32 %v558, 2147483648
    %v600 = vor.u32 1.1754944e-38, %v599
    %v601 = vsel %vm598, %v600, %v596
    %v602 = vmul.f32 %v492, %v601
    %v603 = vrcp.pop %v559
    %v604 = vmul.f32 %v559, %v603
    %v605 = vsub.f32 1.0, %v604
    %v606 = vmul.f32 %v603, %v605
    %v607 = vadd.f32 %v603, %v606
    %vm608 = vweird.f32 %v559
    %vm609 = vweird.f32 %v603
    %vm610 = vmor %vm608, %vm609
    %v611 = vsel %vm610, %v603, %v607
    %v612 = vand.u32 2147483647, %v559
    %vm613 = vcmp.eq.f32.partialorder %v612, 8.507059e+37
    %v614 = vand.u32 %v559, 2147483648
    %v615 = vor.u32 1.1754944e-38, %v614
    %v616 = vsel %vm613, %v615, %v611
    %v617 = vmul.f32 %v494, %v616
    %v618 = vrcp.pop %v560
    %v619 = vmul.f32 %v560, %v618
    %v620 = vsub.f32 1.0, %v619
    %v621 = vmul.f32 %v618, %v620
    %v622 = vadd.f32 %v618, %v621
    %vm623 = vweird.f32 %v560
    %vm624 = vweird.f32 %v618
    %vm625 = vmor %vm623, %vm624
    %v626 = vsel %vm625, %v618, %v622
    %v627 = vand.u32 2147483647, %v560
    %vm628 = vcmp.eq.f32.partialorder %v627, 8.507059e+37
    %v629 = vand.u32 %v560, 2147483648
    %v630 = vor.u32 1.1754944e-38, %v629
    %v631 = vsel %vm628, %v630, %v626
    %v632 = vmul.f32 %v496, %v631
    %v633 = vrcp.pop %v561
    %v634 = vmul.f32 %v561, %v633
    %v635 = vsub.f32 1.0, %v634
    %v636 = vmul.f32 %v633, %v635
    %v637 = vadd.f32 %v633, %v636
    %vm638 = vweird.f32 %v561
    %vm639 = vweird.f32 %v633
    %vm640 = vmor %vm638, %vm639
    %v641 = vsel %vm640, %v633, %v637
    %v642 = vand.u32 2147483647, %v561
    %vm643 = vcmp.eq.f32.partialorder %v642, 8.507059e+37
    %v644 = vand.u32 %v561, 2147483648
    %v645 = vor.u32 1.1754944e-38, %v644
    %v646 = vsel %vm643, %v645, %v641
    %v647 = vmul.f32 %v498, %v646
    %v648 = vrcp.pop %v562
    %v649 = vmul.f32 %v562, %v648
    %v650 = vsub.f32 1.0, %v649
    %v651 = vmul.f32 %v648, %v650
    %v652 = vadd.f32 %v648, %v651
    %vm653 = vweird.f32 %v562
    %vm654 = vweird.f32 %v648
    %vm655 = vmor %vm653, %vm654
    %v656 = vsel %vm655, %v648, %v652
    %v657 = vand.u32 2147483647, %v562
    %vm658 = vcmp.eq.f32.partialorder %v657, 8.507059e+37
    %v659 = vand.u32 %v562, 2147483648
    %v660 = vor.u32 1.1754944e-38, %v659
    %v661 = vsel %vm658, %v660, %v656
    %v662 = vmul.f32 %v500, %v661
    %v663 = vrcp.pop %v563
    %v664 = vmul.f32 %v563, %v663
    %v665 = vsub.f32 1.0, %v664
    %v666 = vmul.f32 %v663, %v665
    %v667 = vadd.f32 %v663, %v666
    %vm668 = vweird.f32 %v563
    %vm669 = vweird.f32 %v663
    %vm670 = vmor %vm668, %vm669
    %v671 = vsel %vm670, %v663, %v667
    %v672 = vand.u32 2147483647, %v563
    %vm673 = vcmp.eq.f32.partialorder %v672, 8.507059e+37
    %v674 = vand.u32 %v563, 2147483648
    %v675 = vor.u32 1.1754944e-38, %v674
    %v676 = vsel %vm673, %v675, %v671
    %v677 = vmul.f32 %v502, %v676
    %v678 = vrcp.pop %v564
    %v679 = vmul.f32 %v564, %v678
    %v680 = vsub.f32 1.0, %v679
    %v681 = vmul.f32 %v678, %v680
    %v682 = vadd.f32 %v678, %v681
    %vm683 = vweird.f32 %v564
    %vm684 = vweird.f32 %v678
    %vm685 = vmor %vm683, %vm684
    %v686 = vsel %vm685, %v678, %v682
    %v687 = vand.u32 2147483647, %v564
    %vm688 = vcmp.eq.f32.partialorder %v687, 8.507059e+37
    %v689 = vand.u32 %v564, 2147483648
    %v690 = vor.u32 1.1754944e-38, %v689
    %v691 = vsel %vm688, %v690, %v686
    %v692 = vmul.f32 %v504, %v691
    %v693 = vld [vmem:[#allocation5] sm:$0xff]
    %v695 = vperm.slane %v693, 0
    %v696 = vlaneseq
    %v697 = vshrl.u32 %v696, 7
    %699 = vset.pattern.permute.xlu0 %v697
    %700 = vperm.xlu0 %699, %v695
    %v701 = vpop.permute.xlu0 %700
    %v702 = vperm.slane %v693, 1
    %v703 = vlaneseq
    %v704 = vshrl.u32 %v703, 7
    %706 = vset.pattern.permute.xlu0 %v704
    %707 = vperm.xlu0 %706, %v702
    %v708 = vpop.permute.xlu0 %707
    %v709 = vperm.slane %v693, 2
    %v710 = vlaneseq
    %v711 = vshrl.u32 %v710, 7
    %713 = vset.pattern.permute.xlu0 %v711
    %714 = vperm.xlu0 %713, %v709
    %v715 = vpop.permute.xlu0 %714
    %v716 = vperm.slane %v693, 3
    %v717 = vlaneseq
    %v718 = vshrl.u32 %v717, 7
    %720 = vset.pattern.permute.xlu0 %v718
    %721 = vperm.xlu0 %720, %v716
    %v722 = vpop.permute.xlu0 %721
    %v723 = vperm.slane %v693, 4
    %v724 = vlaneseq
    %v725 = vshrl.u32 %v724, 7
    %727 = vset.pattern.permute.xlu0 %v725
    %728 = vperm.xlu0 %727, %v723
    %v729 = vpop.permute.xlu0 %728
    %v730 = vperm.slane %v693, 5
    %v731 = vlaneseq
    %v732 = vshrl.u32 %v731, 7
    %734 = vset.pattern.permute.xlu0 %v732
    %735 = vperm.xlu0 %734, %v730
    %v736 = vpop.permute.xlu0 %735
    %v737 = vperm.slane %v693, 6
    %v738 = vlaneseq
    %v739 = vshrl.u32 %v738, 7
    %741 = vset.pattern.permute.xlu0 %v739
    %742 = vperm.xlu0 %741, %v737
    %v743 = vpop.permute.xlu0 %742
    %v744 = vperm.slane %v693, 7
    %v745 = vlaneseq
    %v746 = vshrl.u32 %v745, 7
    %748 = vset.pattern.permute.xlu0 %v746
    %749 = vperm.xlu0 %748, %v744
    %v750 = vpop.permute.xlu0 %749
    %v759 = vmul.f32 %v587, %v701
    %v760 = vmul.f32 %v602, %v708
    %v761 = vmul.f32 %v617, %v715
    %v762 = vmul.f32 %v632, %v722
    %v763 = vmul.f32 %v647, %v729
    %v764 = vmul.f32 %v662, %v736
    %v765 = vmul.f32 %v677, %v743
    %v766 = vmul.f32 %v692, %v750
    %v767 = vld [vmem:[#allocation2] sm:$0xff]
    %v768 = vld [vmem:[#allocation2 + $0x8] sm:$0xff]
    %v769 = vld [vmem:[#allocation2 + $0x10] sm:$0xff]
    %v770 = vld [vmem:[#allocation2 + $0x18] sm:$0xff]
    %v771 = vld [vmem:[#allocation2 + $0x20] sm:$0xff]
    %v772 = vld [vmem:[#allocation2 + $0x28] sm:$0xff]
    %v773 = vld [vmem:[#allocation2 + $0x30] sm:$0xff]
    %v774 = vld [vmem:[#allocation2 + $0x38] sm:$0xff]
    %776 = vset.pattern.permute.xlu0 0
    %777 = vperm.xlu0 %776, %v759
    %v778 = vpop.permute.xlu0 %777
    %v779 = vperm.slane %v778, %v436
    %v780 = vsel %vm460, %v779, 0
    %782 = vmatpush.msra.mxu0 0.0
    %783 = vmatpush.msra.mxu0 0.0
    %784 = vmatpush.msra.mxu0 0.0
    %785 = vmatpush.msra.mxu0 0.0
    %786 = vmatpush.msra.mxu0 0.0
    %787 = vmatpush.msra.mxu0 0.0
    %788 = vmatpush.msra.mxu0 0.0
    %789 = vmatpush.msra.mxu0 0.0
    %790 = vmatpush.msra.mxu0 0.0
    %791 = vmatpush.msra.mxu0 0.0
    %792 = vmatpush.msra.mxu0 0.0
    %793 = vmatpush.msra.mxu0 0.0
    %794 = vmatpush.msra.mxu0 0.0
    %795 = vmatpush.msra.mxu0 0.0
    %796 = vmatpush.msra.mxu0 0.0
    %797 = vmatpush.msra.mxu0 %v767
    %798 = vmatmul.f32.gmra.mxu0 %v780
    %v799 = vpop.f32.mrf.mxu0
    %v800 = vadd.f32 0.0, %v799
    %801 = vdwg.mxu0
    %803 = vset.pattern.permute.xlu0 0
    %804 = vperm.xlu0 %803, %v760
    %v805 = vpop.permute.xlu0 %804
    %v806 = vperm.slane %v805, %v436
    %v807 = vsel %vm460, %v806, 0
    %809 = vmatpush.msra.mxu0 0.0
    %810 = vmatpush.msra.mxu0 0.0
    %811 = vmatpush.msra.mxu0 0.0
    %812 = vmatpush.msra.mxu0 0.0
    %813 = vmatpush.msra.mxu0 0.0
    %814 = vmatpush.msra.mxu0 0.0
    %815 = vmatpush.msra.mxu0 0.0
    %816 = vmatpush.msra.mxu0 0.0
    %817 = vmatpush.msra.mxu0 0.0
    %818 = vmatpush.msra.mxu0 0.0
    %819 = vmatpush.msra.mxu0 0.0
    %820 = vmatpush.msra.mxu0 0.0
    %821 = vmatpush.msra.mxu0 0.0
    %822 = vmatpush.msra.mxu0 0.0
    %823 = vmatpush.msra.mxu0 0.0
    %824 = vmatpush.msra.mxu0 %v768
    %825 = vmatmul.f32.gmra.mxu0 %v807
    %v826 = vpop.f32.mrf.mxu0
    %v827 = vadd.f32 0.0, %v826
    %828 = vdwg.mxu0
    %830 = vset.pattern.permute.xlu0 0
    %831 = vperm.xlu0 %830, %v761
    %v832 = vpop.permute.xlu0 %831
    %v833 = vperm.slane %v832, %v436
    %v834 = vsel %vm460, %v833, 0
    %836 = vmatpush.msra.mxu0 0.0
    %837 = vmatpush.msra.mxu0 0.0
    %838 = vmatpush.msra.mxu0 0.0
    %839 = vmatpush.msra.mxu0 0.0
    %840 = vmatpush.msra.mxu0 0.0
    %841 = vmatpush.msra.mxu0 0.0
    %842 = vmatpush.msra.mxu0 0.0
    %843 = vmatpush.msra.mxu0 0.0
    %844 = vmatpush.msra.mxu0 0.0
    %845 = vmatpush.msra.mxu0 0.0
    %846 = vmatpush.msra.mxu0 0.0
    %847 = vmatpush.msra.mxu0 0.0
    %848 = vmatpush.msra.mxu0 0.0
    %849 = vmatpush.msra.mxu0 0.0
    %850 = vmatpush.msra.mxu0 0.0
    %851 = vmatpush.msra.mxu0 %v769
    %852 = vmatmul.f32.gmra.mxu0 %v834
    %v853 = vpop.f32.mrf.mxu0
    %v854 = vadd.f32 0.0, %v853
    %855 = vdwg.mxu0
    %857 = vset.pattern.permute.xlu0 0
    %858 = vperm.xlu0 %857, %v762
    %v859 = vpop.permute.xlu0 %858
    %v860 = vperm.slane %v859, %v436
    %v861 = vsel %vm460, %v860, 0
    %863 = vmatpush.msra.mxu0 0.0
    %864 = vmatpush.msra.mxu0 0.0
    %865 = vmatpush.msra.mxu0 0.0
    %866 = vmatpush.msra.mxu0 0.0
    %867 = vmatpush.msra.mxu0 0.0
    %868 = vmatpush.msra.mxu0 0.0
    %869 = vmatpush.msra.mxu0 0.0
    %870 = vmatpush.msra.mxu0 0.0
    %871 = vmatpush.msra.mxu0 0.0
    %872 = vmatpush.msra.mxu0 0.0
    %873 = vmatpush.msra.mxu0 0.0
    %874 = vmatpush.msra.mxu0 0.0
    %875 = vmatpush.msra.mxu0 0.0
    %876 = vmatpush.msra.mxu0 0.0
    %877 = vmatpush.msra.mxu0 0.0
    %878 = vmatpush.msra.mxu0 %v770
    %879 = vmatmul.f32.gmra.mxu0 %v861
    %v880 = vpop.f32.mrf.mxu0
    %v881 = vadd.f32 0.0, %v880
    %882 = vdwg.mxu0
    %884 = vset.pattern.permute.xlu0 0
    %885 = vperm.xlu0 %884, %v763
    %v886 = vpop.permute.xlu0 %885
    %v887 = vperm.slane %v886, %v436
    %v888 = vsel %vm460, %v887, 0
    %890 = vmatpush.msra.mxu0 0.0
    %891 = vmatpush.msra.mxu0 0.0
    %892 = vmatpush.msra.mxu0 0.0
    %893 = vmatpush.msra.mxu0 0.0
    %894 = vmatpush.msra.mxu0 0.0
    %895 = vmatpush.msra.mxu0 0.0
    %896 = vmatpush.msra.mxu0 0.0
    %897 = vmatpush.msra.mxu0 0.0
    %898 = vmatpush.msra.mxu0 0.0
    %899 = vmatpush.msra.mxu0 0.0
    %900 = vmatpush.msra.mxu0 0.0
    %901 = vmatpush.msra.mxu0 0.0
    %902 = vmatpush.msra.mxu0 0.0
    %903 = vmatpush.msra.mxu0 0.0
    %904 = vmatpush.msra.mxu0 0.0
    %905 = vmatpush.msra.mxu0 %v771
    %906 = vmatmul.f32.gmra.mxu0 %v888
    %v907 = vpop.f32.mrf.mxu0
    %v908 = vadd.f32 0.0, %v907
    %909 = vdwg.mxu0
    %911 = vset.pattern.permute.xlu0 0
    %912 = vperm.xlu0 %911, %v764
    %v913 = vpop.permute.xlu0 %912
    %v914 = vperm.slane %v913, %v436
    %v915 = vsel %vm460, %v914, 0
    %917 = vmatpush.msra.mxu0 0.0
    %918 = vmatpush.msra.mxu0 0.0
    %919 = vmatpush.msra.mxu0 0.0
    %920 = vmatpush.msra.mxu0 0.0
    %921 = vmatpush.msra.mxu0 0.0
    %922 = vmatpush.msra.mxu0 0.0
    %923 = vmatpush.msra.mxu0 0.0
    %924 = vmatpush.msra.mxu0 0.0
    %925 = vmatpush.msra.mxu0 0.0
    %926 = vmatpush.msra.mxu0 0.0
    %927 = vmatpush.msra.mxu0 0.0
    %928 = vmatpush.msra.mxu0 0.0
    %929 = vmatpush.msra.mxu0 0.0
    %930 = vmatpush.msra.mxu0 0.0
    %931 = vmatpush.msra.mxu0 0.0
    %932 = vmatpush.msra.mxu0 %v772
    %933 = vmatmul.f32.gmra.mxu0 %v915
    %v934 = vpop.f32.mrf.mxu0
    %v935 = vadd.f32 0.0, %v934
    %936 = vdwg.mxu0
    %938 = vset.pattern.permute.xlu0 0
    %939 = vperm.xlu0 %938, %v765
    %v940 = vpop.permute.xlu0 %939
    %v941 = vperm.slane %v940, %v436
    %v942 = vsel %vm460, %v941, 0
    %944 = vmatpush.msra.mxu0 0.0
    %945 = vmatpush.msra.mxu0 0.0
    %946 = vmatpush.msra.mxu0 0.0
    %947 = vmatpush.msra.mxu0 0.0
    %948 = vmatpush.msra.mxu0 0.0
    %949 = vmatpush.msra.mxu0 0.0
    %950 = vmatpush.msra.mxu0 0.0
    %951 = vmatpush.msra.mxu0 0.0
    %952 = vmatpush.msra.mxu0 0.0
    %953 = vmatpush.msra.mxu0 0.0
    %954 = vmatpush.msra.mxu0 0.0
    %955 = vmatpush.msra.mxu0 0.0
    %956 = vmatpush.msra.mxu0 0.0
    %957 = vmatpush.msra.mxu0 0.0
    %958 = vmatpush.msra.mxu0 0.0
    %959 = vmatpush.msra.mxu0 %v773
    %960 = vmatmul.f32.gmra.mxu0 %v942
    %v961 = vpop.f32.mrf.mxu0
    %v962 = vadd.f32 0.0, %v961
    %963 = vdwg.mxu0
    %965 = vset.pattern.permute.xlu0 0
    %966 = vperm.xlu0 %965, %v766
    %v967 = vpop.permute.xlu0 %966
    %v968 = vperm.slane %v967, %v436
    %v969 = vsel %vm460, %v968, 0
    %971 = vmatpush.msra.mxu0 0.0
    %972 = vmatpush.msra.mxu0 0.0
    %973 = vmatpush.msra.mxu0 0.0
    %974 = vmatpush.msra.mxu0 0.0
    %975 = vmatpush.msra.mxu0 0.0
    %976 = vmatpush.msra.mxu0 0.0
    %977 = vmatpush.msra.mxu0 0.0
    %978 = vmatpush.msra.mxu0 0.0
    %979 = vmatpush.msra.mxu0 0.0
    %980 = vmatpush.msra.mxu0 0.0
    %981 = vmatpush.msra.mxu0 0.0
    %982 = vmatpush.msra.mxu0 0.0
    %983 = vmatpush.msra.mxu0 0.0
    %984 = vmatpush.msra.mxu0 0.0
    %985 = vmatpush.msra.mxu0 0.0
    %986 = vmatpush.msra.mxu0 %v774
    %987 = vmatmul.f32.gmra.mxu0 %v969
    %v988 = vpop.f32.mrf.mxu0
    %v989 = vadd.f32 0.0, %v988
    %990 = vdwg.mxu0
    %v991 = vld [vmem:[#allocation10] sm:$0xff]
    %v992 = vld [vmem:[#allocation10 + $0x8] sm:$0xff]
    %v993 = vld [vmem:[#allocation10 + $0x10] sm:$0xff]
    %v994 = vld [vmem:[#allocation10 + $0x18] sm:$0xff]
    %v1003 = vrot.slane %v827, 7
    %v1004 = vsel %vm445, %v1003, %v800
    %v1005 = vrot.slane %v854, 6
    %v1006 = vsel %vm447, %v1005, %v1004
    %v1007 = vrot.slane %v881, 5
    %v1008 = vsel %vm449, %v1007, %v1006
    %v1009 = vrot.slane %v908, 4
    %v1010 = vsel %vm451, %v1009, %v1008
    %v1011 = vrot.slane %v935, 3
    %v1012 = vsel %vm453, %v1011, %v1010
    %v1013 = vrot.slane %v962, 2
    %v1014 = vsel %vm455, %v1013, %v1012
    %v1015 = vrot.slane %v989, 1
    %v1016 = vsel %vm457, %v1015, %v1014
    %v1017 = vsel %vm123, %v1016, 0
    %1019 = vmatpush.msra.mxu0 0.0
    %1020 = vmatpush.msra.mxu0 0.0
    %1021 = vmatpush.msra.mxu0 0.0
    %1022 = vmatpush.msra.mxu0 0.0
    %1023 = vmatpush.msra.mxu0 0.0
    %1024 = vmatpush.msra.mxu0 0.0
    %1025 = vmatpush.msra.mxu0 0.0
    %1026 = vmatpush.msra.mxu0 0.0
    %1027 = vmatpush.msra.mxu0 0.0
    %1028 = vmatpush.msra.mxu0 0.0
    %1029 = vmatpush.msra.mxu0 0.0
    %1030 = vmatpush.msra.mxu0 0.0
    %1031 = vmatpush.msra.mxu0 %v994
    %1032 = vmatpush.msra.mxu0 %v993
    %1033 = vmatpush.msra.mxu0 %v992
    %1034 = vmatpush.msra.mxu0 %v991
    %1035 = vmatmul.f32.gmra.mxu0 %v1017
    %v1036 = vpop.f32.mrf.mxu0
    %v1037 = vadd.f32 0.0, %v1036
    %1038 = vdwg.mxu0
    %1039 = vrot.lane.b32.xlu0 %v189, 96
    %v1040 = vpop.permute.xlu0 %1039
    %v1042 = vadd.f32 %v1037, %v1040
    %v1043 = vtanh.pop %v1042
    %v1045 = vrot.slane %v1042, 1
    %v1046 = vrot.slane %v1042, 2
    %v1047 = vrot.slane %v1042, 3
    %v1048 = vrot.slane %v1042, 4
    %v1049 = vrot.slane %v1042, 5
    %v1050 = vrot.slane %v1042, 6
    %v1051 = vrot.slane %v1042, 7
    %v1052 = vperm.slane %v1042, 0
    %v1053 = vperm.slane %v1045, 0
    %v1054 = vperm.slane %v1046, 0
    %v1055 = vperm.slane %v1047, 0
    %v1056 = vperm.slane %v1048, 0
    %v1057 = vperm.slane %v1049, 0
    %v1058 = vperm.slane %v1050, 0
    %v1059 = vperm.slane %v1051, 0
    %v1068 = vadd.f32 %v166, %v1052
    %v1069 = vadd.f32 %v169, %v1053
    %v1070 = vadd.f32 %v172, %v1054
    %v1071 = vadd.f32 %v175, %v1055
    %v1072 = vadd.f32 %v178, %v1056
    %v1073 = vadd.f32 %v181, %v1057
    %v1074 = vadd.f32 %v184, %v1058
    %v1075 = vadd.f32 %v187, %v1059
    %v1076 = vxor.u32 %v1068, 2147483648
    %v1077 = vxor.u32 %v1069, 2147483648
    %v1078 = vxor.u32 %v1070, 2147483648
    %v1079 = vxor.u32 %v1071, 2147483648
    %v1080 = vxor.u32 %v1072, 2147483648
    %v1081 = vxor.u32 %v1073, 2147483648
    %v1082 = vxor.u32 %v1074, 2147483648
    %v1083 = vxor.u32 %v1075, 2147483648
    %v1084 = vmul.f32 %v1076, 1.442695
    %v1085 = vpow.pop %v1084
    %v1086 = vmul.f32 %v1077, 1.442695
    %v1087 = vpow.pop %v1086
    %v1088 = vmul.f32 %v1078, 1.442695
    %v1089 = vpow.pop %v1088
    %v1090 = vmul.f32 %v1079, 1.442695
    %v1091 = vpow.pop %v1090
    %v1092 = vmul.f32 %v1080, 1.442695
    %v1093 = vpow.pop %v1092
    %v1094 = vmul.f32 %v1081, 1.442695
    %v1095 = vpow.pop %v1094
    %v1096 = vmul.f32 %v1082, 1.442695
    %v1097 = vpow.pop %v1096
    %v1098 = vmul.f32 %v1083, 1.442695
    %v1099 = vpow.pop %v1098
    %v1100 = vadd.f32 %v1085, 1.0
    %v1101 = vadd.f32 %v1087, 1.0
    %v1102 = vadd.f32 %v1089, 1.0
    %v1103 = vadd.f32 %v1091, 1.0
    %v1104 = vadd.f32 %v1093, 1.0
    %v1105 = vadd.f32 %v1095, 1.0
    %v1106 = vadd.f32 %v1097, 1.0
    %v1107 = vadd.f32 %v1099, 1.0
    %v1108 = vrcp.pop %v1100
    %v1109 = vmul.f32 %v1100, %v1108
    %v1110 = vsub.f32 1.0, %v1109
    %v1111 = vmul.f32 %v1108, %v1110
    %v1112 = vadd.f32 %v1108, %v1111
    %vm1113 = vweird.f32 %v1100
    %vm1114 = vweird.f32 %v1108
    %vm1115 = vmor %vm1113, %vm1114
    %v1116 = vsel %vm1115, %v1108, %v1112
    %v1117 = vand.u32 2147483647, %v1100
    %vm1118 = vcmp.eq.f32.partialorder %v1117, 8.507059e+37
    %v1119 = vand.u32 %v1100, 2147483648
    %v1120 = vor.u32 1.1754944e-38, %v1119
    %v1121 = vsel %vm1118, %v1120, %v1116
    %v1122 = vmul.f32 1.0, %v1121
    %v1123 = vrcp.pop %v1101
    %v1124 = vmul.f32 %v1101, %v1123
    %v1125 = vsub.f32 1.0, %v1124
    %v1126 = vmul.f32 %v1123, %v1125
    %v1127 = vadd.f32 %v1123, %v1126
    %vm1128 = vweird.f32 %v1101
    %vm1129 = vweird.f32 %v1123
    %vm1130 = vmor %vm1128, %vm1129
    %v1131 = vsel %vm1130, %v1123, %v1127
    %v1132 = vand.u32 2147483647, %v1101
    %vm1133 = vcmp.eq.f32.partialorder %v1132, 8.507059e+37
    %v1134 = vand.u32 %v1101, 2147483648
    %v1135 = vor.u32 1.1754944e-38, %v1134
    %v1136 = vsel %vm1133, %v1135, %v1131
    %v1137 = vmul.f32 1.0, %v1136
    %v1138 = vrcp.pop %v1102
    %v1139 = vmul.f32 %v1102, %v1138
    %v1140 = vsub.f32 1.0, %v1139
    %v1141 = vmul.f32 %v1138, %v1140
    %v1142 = vadd.f32 %v1138, %v1141
    %vm1143 = vweird.f32 %v1102
    %vm1144 = vweird.f32 %v1138
    %vm1145 = vmor %vm1143, %vm1144
    %v1146 = vsel %vm1145, %v1138, %v1142
    %v1147 = vand.u32 2147483647, %v1102
    %vm1148 = vcmp.eq.f32.partialorder %v1147, 8.507059e+37
    %v1149 = vand.u32 %v1102, 2147483648
    %v1150 = vor.u32 1.1754944e-38, %v1149
    %v1151 = vsel %vm1148, %v1150, %v1146
    %v1152 = vmul.f32 1.0, %v1151
    %v1153 = vrcp.pop %v1103
    %v1154 = vmul.f32 %v1103, %v1153
    %v1155 = vsub.f32 1.0, %v1154
    %v1156 = vmul.f32 %v1153, %v1155
    %v1157 = vadd.f32 %v1153, %v1156
    %vm1158 = vweird.f32 %v1103
    %vm1159 = vweird.f32 %v1153
    %vm1160 = vmor %vm1158, %vm1159
    %v1161 = vsel %vm1160, %v1153, %v1157
    %v1162 = vand.u32 2147483647, %v1103
    %vm1163 = vcmp.eq.f32.partialorder %v1162, 8.507059e+37
    %v1164 = vand.u32 %v1103, 2147483648
    %v1165 = vor.u32 1.1754944e-38, %v1164
    %v1166 = vsel %vm1163, %v1165, %v1161
    %v1167 = vmul.f32 1.0, %v1166
    %v1168 = vrcp.pop %v1104
    %v1169 = vmul.f32 %v1104, %v1168
    %v1170 = vsub.f32 1.0, %v1169
    %v1171 = vmul.f32 %v1168, %v1170
    %v1172 = vadd.f32 %v1168, %v1171
    %vm1173 = vweird.f32 %v1104
    %vm1174 = vweird.f32 %v1168
    %vm1175 = vmor %vm1173, %vm1174
    %v1176 = vsel %vm1175, %v1168, %v1172
    %v1177 = vand.u32 2147483647, %v1104
    %vm1178 = vcmp.eq.f32.partialorder %v1177, 8.507059e+37
    %v1179 = vand.u32 %v1104, 2147483648
    %v1180 = vor.u32 1.1754944e-38, %v1179
    %v1181 = vsel %vm1178, %v1180, %v1176
    %v1182 = vmul.f32 1.0, %v1181
    %v1183 = vrcp.pop %v1105
    %v1184 = vmul.f32 %v1105, %v1183
    %v1185 = vsub.f32 1.0, %v1184
    %v1186 = vmul.f32 %v1183, %v1185
    %v1187 = vadd.f32 %v1183, %v1186
    %vm1188 = vweird.f32 %v1105
    %vm1189 = vweird.f32 %v1183
    %vm1190 = vmor %vm1188, %vm1189
    %v1191 = vsel %vm1190, %v1183, %v1187
    %v1192 = vand.u32 2147483647, %v1105
    %vm1193 = vcmp.eq.f32.partialorder %v1192, 8.507059e+37
    %v1194 = vand.u32 %v1105, 2147483648
    %v1195 = vor.u32 1.1754944e-38, %v1194
    %v1196 = vsel %vm1193, %v1195, %v1191
    %v1197 = vmul.f32 1.0, %v1196
    %v1198 = vrcp.pop %v1106
    %v1199 = vmul.f32 %v1106, %v1198
    %v1200 = vsub.f32 1.0, %v1199
    %v1201 = vmul.f32 %v1198, %v1200
    %v1202 = vadd.f32 %v1198, %v1201
    %vm1203 = vweird.f32 %v1106
    %vm1204 = vweird.f32 %v1198
    %vm1205 = vmor %vm1203, %vm1204
    %v1206 = vsel %vm1205, %v1198, %v1202
    %v1207 = vand.u32 2147483647, %v1106
    %vm1208 = vcmp.eq.f32.partialorder %v1207, 8.507059e+37
    %v1209 = vand.u32 %v1106, 2147483648
    %v1210 = vor.u32 1.1754944e-38, %v1209
    %v1211 = vsel %vm1208, %v1210, %v1206
    %v1212 = vmul.f32 1.0, %v1211
    %v1213 = vrcp.pop %v1107
    %v1214 = vmul.f32 %v1107, %v1213
    %v1215 = vsub.f32 1.0, %v1214
    %v1216 = vmul.f32 %v1213, %v1215
    %v1217 = vadd.f32 %v1213, %v1216
    %vm1218 = vweird.f32 %v1107
    %vm1219 = vweird.f32 %v1213
    %vm1220 = vmor %vm1218, %vm1219
    %v1221 = vsel %vm1220, %v1213, %v1217
    %v1222 = vand.u32 2147483647, %v1107
    %vm1223 = vcmp.eq.f32.partialorder %v1222, 8.507059e+37
    %v1224 = vand.u32 %v1107, 2147483648
    %v1225 = vor.u32 1.1754944e-38, %v1224
    %v1226 = vsel %vm1223, %v1225, %v1221
    %v1227 = vmul.f32 1.0, %v1226
    %1229 = vset.pattern.permute.xlu0 32
    %1230 = vperm.xlu0 %1229, %v1122
    %v1231 = vpop.permute.xlu0 %1230
    %1234 = vset.pattern.permute.xlu0 32
    %1235 = vperm.xlu0 %1234, %v1137
    %v1236 = vpop.permute.xlu0 %1235
    %1239 = vset.pattern.permute.xlu0 32
    %1240 = vperm.xlu0 %1239, %v1152
    %v1241 = vpop.permute.xlu0 %1240
    %1244 = vset.pattern.permute.xlu0 32
    %1245 = vperm.xlu0 %1244, %v1167
    %v1246 = vpop.permute.xlu0 %1245
    %1249 = vset.pattern.permute.xlu0 32
    %1250 = vperm.xlu0 %1249, %v1182
    %v1251 = vpop.permute.xlu0 %1250
    %1254 = vset.pattern.permute.xlu0 32
    %1255 = vperm.xlu0 %1254, %v1197
    %v1256 = vpop.permute.xlu0 %1255
    %1259 = vset.pattern.permute.xlu0 32
    %1260 = vperm.xlu0 %1259, %v1212
    %v1261 = vpop.permute.xlu0 %1260
    %1264 = vset.pattern.permute.xlu0 32
    %1265 = vperm.xlu0 %1264, %v1227
    %v1266 = vpop.permute.xlu0 %1265
    %v1268 = vmul.f32 %v1231, %v111
    %v1269 = vmul.f32 %v1236, %v112
    %v1270 = vmul.f32 %v1241, %v113
    %v1271 = vmul.f32 %v1246, %v114
    %v1272 = vmul.f32 %v1251, %v115
    %v1273 = vmul.f32 %v1256, %v116
    %v1274 = vmul.f32 %v1261, %v117
    %v1275 = vmul.f32 %v1266, %v118
    %v1276 = vsub.f32 1.0, %v1122
    %v1277 = vsub.f32 1.0, %v1137
    %v1278 = vsub.f32 1.0, %v1152
    %v1279 = vsub.f32 1.0, %v1167
    %v1280 = vsub.f32 1.0, %v1182
    %v1281 = vsub.f32 1.0, %v1197
    %v1282 = vsub.f32 1.0, %v1212
    %v1283 = vsub.f32 1.0, %v1227
    %v1285 = vrot.slane %v1043, 1
    %v1286 = vrot.slane %v1043, 2
    %v1287 = vrot.slane %v1043, 3
    %v1288 = vrot.slane %v1043, 4
    %v1289 = vrot.slane %v1043, 5
    %v1290 = vrot.slane %v1043, 6
    %v1291 = vrot.slane %v1043, 7
    %1293 = vset.pattern.permute.xlu0 32
    %1294 = vperm.xlu0 %1293, %v1276
    %v1295 = vpop.permute.xlu0 %1294
    %1298 = vset.pattern.permute.xlu0 32
    %1299 = vperm.xlu0 %1298, %v1277
    %v1300 = vpop.permute.xlu0 %1299
    %1303 = vset.pattern.permute.xlu0 32
    %1304 = vperm.xlu0 %1303, %v1278
    %v1305 = vpop.permute.xlu0 %1304
    %1308 = vset.pattern.permute.xlu0 32
    %1309 = vperm.xlu0 %1308, %v1279
    %v1310 = vpop.permute.xlu0 %1309
    %1313 = vset.pattern.permute.xlu0 32
    %1314 = vperm.xlu0 %1313, %v1280
    %v1315 = vpop.permute.xlu0 %1314
    %1318 = vset.pattern.permute.xlu0 32
    %1319 = vperm.xlu0 %1318, %v1281
    %v1320 = vpop.permute.xlu0 %1319
    %1323 = vset.pattern.permute.xlu0 32
    %1324 = vperm.xlu0 %1323, %v1282
    %v1325 = vpop.permute.xlu0 %1324
    %1328 = vset.pattern.permute.xlu0 32
    %1329 = vperm.xlu0 %1328, %v1283
    %v1330 = vpop.permute.xlu0 %1329
    %v1332 = vperm.slane %v1043, 0
    %v1333 = vperm.slane %v1285, 0
    %v1334 = vperm.slane %v1286, 0
    %v1335 = vperm.slane %v1287, 0
    %v1336 = vperm.slane %v1288, 0
    %v1337 = vperm.slane %v1289, 0
    %v1338 = vperm.slane %v1290, 0
    %v1339 = vperm.slane %v1291, 0
    %v1348 = vmul.f32 %v1295, %v1332
    %v1349 = vmul.f32 %v1300, %v1333
    %v1350 = vmul.f32 %v1305, %v1334
    %v1351 = vmul.f32 %v1310, %v1335
    %v1352 = vmul.f32 %v1315, %v1336
    %v1353 = vmul.f32 %v1320, %v1337
    %v1354 = vmul.f32 %v1325, %v1338
    %v1355 = vmul.f32 %v1330, %v1339
    %v1356 = vadd.f32 %v1268, %v1348
    %v1357 = vadd.f32 %v1269, %v1349
    %v1358 = vadd.f32 %v1270, %v1350
    %v1359 = vadd.f32 %v1271, %v1351
    %v1360 = vadd.f32 %v1272, %v1352
    %v1361 = vadd.f32 %v1273, %v1353
    %v1362 = vadd.f32 %v1274, %v1354
    %v1363 = vadd.f32 %v1275, %v1355
    %1365 = vst.msk [vmem:[#allocation11] sm:$0xff] %vm123, %v1016
    %v1366 = vsel %vm445, %v806, %v779
    %v1367 = vsel %vm447, %v833, %v1366
    %v1368 = vsel %vm449, %v860, %v1367
    %v1369 = vsel %vm451, %v887, %v1368
    %v1370 = vsel %vm453, %v914, %v1369
    %v1371 = vsel %vm455, %v941, %v1370
    %v1372 = vsel %vm457, %v968, %v1371
    %1374 = vst.msk [vmem:[#allocation12] sm:$0xff] %vm460, %v1372
    %1375 = vst.msk [vmem:[#allocation14] sm:$0xff] %vm123, %v1356
    %1376 = vst.msk [vmem:[#allocation14 + $0x8] sm:$0xff] %vm123, %v1357
    %1377 = vst.msk [vmem:[#allocation14 + $0x10] sm:$0xff] %vm123, %v1358
    %1378 = vst.msk [vmem:[#allocation14 + $0x18] sm:$0xff] %vm123, %v1359
    %1379 = vst.msk [vmem:[#allocation14 + $0x20] sm:$0xff] %vm123, %v1360
    %1380 = vst.msk [vmem:[#allocation14 + $0x28] sm:$0xff] %vm123, %v1361
    %1381 = vst.msk [vmem:[#allocation14 + $0x30] sm:$0xff] %vm123, %v1362
    %1382 = vst.msk [vmem:[#allocation14 + $0x38] sm:$0xff] %vm123, %v1363
    // Predicated region
    $region58: #{tpu_custom_call.1} parent=1 // pred_check
      _
    $region59: #{tpu_custom_call.1} parent=1 // pred_check_branch
      %1384 = sbr.rel (0) target = $region61
    $region60: #{tpu_custom_call.1} parent=1 // pred_region
      %1386 = vsyncadd [#allocation4], 0
      %s1388 = sshll.u32 [#allocation11], 4
      %s1389 = int_to_ptr.vmem [resolvable:$true] %s1388
      %s1390 = sshll.u32 %s9, 4
      %s1391 = int_to_ptr.hbm [resolvable:$true] %s1390
      %1393 = dma.vmem_to_hbm [thread:$0]  %s1389, 128, %s1391, [#allocation4]
    $region61: #{tpu_custom_call.1} parent=1 // pred_fallthru
      _
    // Predicated region
    $region62: #{tpu_custom_call.1} parent=1 // pred_check
      _
    $region63: #{tpu_custom_call.1} parent=1 // pred_check_branch
      %1395 = sbr.rel (0) target = $region65
    $region64: #{tpu_custom_call.1} parent=1 // pred_region
      %1397 = vsyncadd [#allocation13], 0
      %s1399 = sshll.u32 [#allocation12], 4
      %s1400 = int_to_ptr.vmem [resolvable:$true] %s1399
      %s1401 = sshll.u32 %s10, 4
      %s1402 = int_to_ptr.hbm [resolvable:$true] %s1401
      %1404 = dma.vmem_to_hbm [thread:$0]  %s1400, 128, %s1402, [#allocation13]
    $region65: #{tpu_custom_call.1} parent=1 // pred_fallthru
      _
    // Predicated region
    $region66: #{tpu_custom_call.1} parent=1 // pred_check
      _
    $region67: #{tpu_custom_call.1} parent=1 // pred_check_branch
      %1406 = sbr.rel (0) target = $region69
    $region68: #{tpu_custom_call.1} parent=1 // pred_region
      %1408 = vsyncadd [#allocation13], 0
      %s1409 = sshll.u32 [#allocation14], 4
      %s1410 = int_to_ptr.vmem [resolvable:$true] %s1409
      %s1411 = sshll.u32 %s11, 4
      %s1412 = int_to_ptr.hbm [resolvable:$true] %s1411
      %1417 = dma.vmem_to_hbm [thread:$0]  %s1410, 1024, %s1412, [#allocation13], 128, 128, 8
    $region69: #{tpu_custom_call.1} parent=1 // pred_fallthru
      _
    // Predicated region
    $region70: #{tpu_custom_call.1} parent=1 // pred_check
      _
    $region71: #{tpu_custom_call.1} parent=1 // pred_check_branch
      %1419 = sbr.rel (0) target = $region73
    $region72: #{tpu_custom_call.1} parent=1 // pred_region
      %1421 = dma.done [#allocation4], 128
    $region73: #{tpu_custom_call.1} parent=1 // pred_fallthru
      _
    // Predicated region
    $region74: #{tpu_custom_call.1} parent=1 // pred_check
      _
    $region75: #{tpu_custom_call.1} parent=1 // pred_check_branch
      %1423 = sbr.rel (0) target = $region77
    $region76: #{tpu_custom_call.1} parent=1 // pred_region
      %1425 = dma.done [#allocation13], 128
    $region77: #{tpu_custom_call.1} parent=1 // pred_fallthru
      _
    // Predicated region
    $region78: #{tpu_custom_call.1} parent=1 // pred_check
      _
    $region79: #{tpu_custom_call.1} parent=1 // pred_check_branch
      %1427 = sbr.rel (0) target = $region81
    $region80: #{tpu_custom_call.1} parent=1 // pred_region
      %1429 = dma.done [#allocation13], 1024
    $region81: #{tpu_custom_call.1} parent=1 // pred_fallthru
      _
    %1430 = vsyncpa [#allocation3], 1
    %1431 = vsyncpa [#allocation6], 1
    %1432 = vsyncpa [#allocation9], 1
    %1433 = vsyncpa [#allocation4], 1
    %1434 = vsyncpa [#allocation13], 1

</llo_original>
